<compile_context>
chip_gen: v5e
topology: v5e:2x2
jax: 0.10.0
libtpu: 0.0.40
codegen_flags: <defaults>
</compile_context>

<pallas_src>
import jax
import jax.numpy as jnp
from jax import lax
from jax.experimental import pallas as pl
from jax.experimental.pallas import tpu as pltpu


def _round_up(x, m):
    return (x + m - 1) // m * m


def _attn_rnn_block_kernel(enc_ref, tgt_ref, h0_ref, ww_ref, wb_ref,
                           wf_ref, bf_ref, out_ref):
    """All decoder RNN layers + per-step dot-product attention in one kernel.

    enc_ref : (B, S, Hp)    encoder outputs (H zero-padded to Hp, lane-dense)
    tgt_ref : (T, B, Hp)    first-layer decoder inputs (time-major)
    h0_ref  : (L, B, Hp)    initial decoder hidden per layer (= last_enc_hidden)
    ww_ref  : (Hp, Hp), wb_ref : (1, Hp)    shared attention Linear
    wf_ref  : (L, 2*Hp, Hp)                 fused [Wih; Whh] per layer
    bf_ref  : (L, 1, Hp)                    fused bias (bih + bhh) per layer
    out_ref : (T, B, Hp)    last-layer decoder outputs (time-major); also used in
                            place as the inter-layer activation buffer.
    """
    B, S, Hp = enc_ref.shape
    T = tgt_ref.shape[0]
    L = wf_ref.shape[0]

    enc = enc_ref[...]                                            # (B, S, Hp)

    # Hoisted attention projection: encW[b, s, :] = enc[b, s, :] @ Ww + Wb.
    # Per step,  attn @ Ww + Wb == p @ encW  because softmax rows sum to 1.
    encw = (jnp.dot(enc.reshape(B * S, Hp), ww_ref[...],
                    preferred_element_type=jnp.float32)
            + wb_ref[...]).reshape(B, S, Hp)

    # Seed the in-place activation buffer with the first layer's inputs.
    out_ref[...] = tgt_ref[...]

    for layer in range(L):                                        # static layer loop
        wf = wf_ref[layer]                                        # (2Hp, Hp), hoisted
        bf = bf_ref[layer]                                        # (1, Hp)

        def step(i, h):
            x_in = out_ref[i]                                     # (B, Hp) prev-layer act

            # score = softmax_s( h . enc[:, s, :] )                -> (B, S)
            score = jnp.sum(h[:, None, :] * enc, axis=-1)
            score = score - jnp.max(score, axis=-1, keepdims=True)
            p = jnp.exp(score)                                    # EUP
            denom = jnp.sum(p, axis=-1, keepdims=True)
            r = pl.reciprocal(denom, approx=True)                 # EUP slot
            r = r * (2.0 - denom * r)                             # one Newton step -> ~f32
            p = p * r

            # attention-weighted, already-projected encoder summary -> (B, Hp)
            wa = jnp.sum(p[:, :, None] * encw, axis=1)

            # dec_input = prev_layer_act[i] + (attn @ Ww + Wb)
            x = x_in + wa

            # Fused Elman RNN cell: h' = tanh([x, h] @ [Wih; Whh] + (bih + bhh))
            xh = jnp.concatenate([x, h], axis=-1)                 # (B, 2Hp)
            h_new = jnp.tanh(
                jnp.dot(xh, wf, preferred_element_type=jnp.float32) + bf)

            out_ref[i] = h_new                                    # in-place writeback
            return h_new                                          # vreg-carried hidden

        lax.fori_loop(0, T, step, h0_ref[layer], unroll=True)


def attn_rnn_block_forward(params, enc_out, first_hid_tgt, last_enc_hidden):
    """Equivalent of AttnRNNBlock.forward (returns dec_out of the last layer)."""
    f32 = jnp.float32
    B, S, H = enc_out.shape
    T = first_hid_tgt.shape[1]
    L = params["Wih"].shape[0]
    Hp = _round_up(H, 128)                        # lane-dense padded hidden size
    pad = Hp - H

    pad_last = lambda x: jnp.pad(x, [(0, 0)] * (x.ndim - 1) + [(0, pad)])

    enc_p = pad_last(enc_out).astype(f32)                          # (B, S, Hp)
    tgt_p = jnp.transpose(pad_last(first_hid_tgt), (1, 0, 2))      # (T, B, Hp)
    h0_p = pad_last(last_enc_hidden).astype(f32)                   # (L, B, Hp)

    # Zero-padded weights: padded columns stay exactly zero through tanh, so the
    # padded lanes of the hidden state remain zero and never affect the real lanes.
    ww_p = jnp.zeros((Hp, Hp), f32).at[:H, :H].set(params["Ww"])
    wb_p = jnp.zeros((1, Hp), f32).at[0, :H].set(params["Wb"])
    wf = jnp.zeros((L, 2 * Hp, Hp), f32)
    wf = wf.at[:, :H, :H].set(params["Wih"])
    wf = wf.at[:, Hp:Hp + H, :H].set(params["Whh"])
    bf = jnp.zeros((L, 1, Hp), f32).at[:, 0, :H].set(params["bih"] + params["bhh"])

    out_tbh = pl.pallas_call(
        _attn_rnn_block_kernel,
        out_shape=jax.ShapeDtypeStruct((T, B, Hp), f32),
        in_specs=[pl.BlockSpec(memory_space=pltpu.MemorySpace.VMEM)] * 7,
        out_specs=pl.BlockSpec(memory_space=pltpu.MemorySpace.VMEM),
    )(enc_p, tgt_p, h0_p, ww_p, wb_p, wf, bf)

    # Back to batch-first and drop the lane padding.
    return jnp.transpose(out_tbh, (1, 0, 2))[:, :, :H]
    # TODO(synk): at production sizes, add a batch-parallel grid (v7x 2 TCs) and tile
    # enc over S with an online softmax to respect v7x's 64 MiB VMEM.


def reference_forward(params, enc_out, first_hid_tgt, last_enc_hidden):
    """Pure-JAX mirror of the PyTorch forward, for correctness checking."""
    hid_tgt = first_hid_tgt
    num_layers = params["Wih"].shape[0]
    for l in range(num_layers):
        h = last_enc_hidden[l]                             # (B, H)
        outs = []
        for i in range(hid_tgt.shape[1]):
            score = jnp.einsum("bh,bsh->bs", h, enc_out)   # (B, S)
            score = jax.nn.softmax(score, axis=-1)
            attn = jnp.einsum("bs,bsh->bh", score, enc_out)
            x = hid_tgt[:, i, :] + attn @ params["Ww"] + params["Wb"]
            h = jnp.tanh(x @ params["Wih"][l] + params["bih"][l]
                         + h @ params["Whh"][l] + params["bhh"][l])
            outs.append(h)
        hid_tgt = jnp.stack(outs, axis=1)
    return hid_tgt


def init_params(key, hidden_size, num_layers):
    """Deterministic synthetic parameters (PyTorch-style uniform(-1/sqrt(H), 1/sqrt(H)))."""
    H = hidden_size
    bound = 1.0 / jnp.sqrt(jnp.float32(H))
    ks = jax.random.split(key, 6)
    u = lambda k, shape: jax.random.uniform(k, shape, jnp.float32, -bound, bound)
    return {
        "Ww":  u(ks[0], (H, H)),                  # shared Linear, (in, out)
        "Wb":  u(ks[1], (H,)),
        "Wih": u(ks[2], (num_layers, H, H)),      # per-layer RNN weights, (in, out)
        "bih": u(ks[3], (num_layers, H)),
        "Whh": u(ks[4], (num_layers, H, H)),
        "bhh": u(ks[5], (num_layers, H)),
    }


if __name__ == "__main__":
    B, S, H, NUM_LAYERS = 2, 8, 32, 2             # input_size == hidden_size == H
    T = S - 1

    key = jax.random.PRNGKey(0)
    k_p, k_enc, k_tgt, k_hid = jax.random.split(key, 4)

    params = init_params(k_p, H, NUM_LAYERS)
    enc_out = jax.random.normal(k_enc, (B, S, H), jnp.float32)
    first_hid_tgt = jax.random.normal(k_tgt, (B, T, H), jnp.float32)
    last_enc_hidden = jax.random.normal(k_hid, (NUM_LAYERS, B, H), jnp.float32)

    fwd = jax.jit(attn_rnn_block_forward)
    dec_out = jax.block_until_ready(
        fwd(params, enc_out, first_hid_tgt, last_enc_hidden))

    ref = reference_forward(params, enc_out, first_hid_tgt, last_enc_hidden)
    assert dec_out.shape == (B, T, H)
    max_err = jnp.max(jnp.abs(dec_out - ref))
    # 1e-3 tolerance: approx-EUP reciprocal (+ Newton refinement) and the algebraic
    # encW hoist reorder a few reductions relative to the reference.
    assert jnp.allclose(dec_out, ref, atol=1e-3, rtol=1e-3), f"max abs err {max_err}"

    print("KERNEL_OK")
</pallas_src>

<mosaic_0001>
module attributes {stable_mosaic.version = 11 : i64} {
  func.func @_attn_rnn_block_kernel(%arg0: memref<2x8x128xf32, #tpu.memory_space<vmem>>, %arg1: memref<7x2x128xf32, #tpu.memory_space<vmem>>, %arg2: memref<2x2x128xf32, #tpu.memory_space<vmem>>, %arg3: memref<128x128xf32, #tpu.memory_space<vmem>>, %arg4: memref<1x128xf32, #tpu.memory_space<vmem>>, %arg5: memref<2x256x128xf32, #tpu.memory_space<vmem>>, %arg6: memref<2x1x128xf32, #tpu.memory_space<vmem>>, %arg7: memref<7x2x128xf32, #tpu.memory_space<vmem>>) attributes {dimension_semantics = [], scalar_prefetch = 0 : i64, scratch_operands = 0 : i64, tpu.core_type = #tpu.core_type<tc>} {
    %c0 = arith.constant 0 : index
    %c0_0 = arith.constant 0 : index
    %c0_1 = arith.constant 0 : index
    %0 = vector.load %arg0[%c0, %c0_0, %c0_1] : memref<2x8x128xf32, #tpu.memory_space<vmem>>, vector<2x8x128xf32>
    %1 = vector.shape_cast %0 : vector<2x8x128xf32> to vector<16x128xf32>
    %c0_2 = arith.constant 0 : index
    %c0_3 = arith.constant 0 : index
    %2 = vector.load %arg3[%c0_2, %c0_3] : memref<128x128xf32, #tpu.memory_space<vmem>>, vector<128x128xf32>
    %cst = arith.constant dense<0.000000e+00> : vector<16x128xf32>
    %3 = tpu.matmul %1, %2, %cst {dimension_numbers = #tpu.dot_dimension_numbers<[1], [0], [0], [1], [0, 0, 1, 1], [], []>} : vector<16x128xf32>, vector<128x128xf32>, vector<16x128xf32> -> vector<16x128xf32>
    %c0_4 = arith.constant 0 : index
    %c0_5 = arith.constant 0 : index
    %4 = vector.load %arg4[%c0_4, %c0_5] : memref<1x128xf32, #tpu.memory_space<vmem>>, vector<1x128xf32>
    %5 = vector.broadcast %4 : vector<1x128xf32> to vector<16x128xf32>
    %6 = arith.addf %3, %5 : vector<16x128xf32>
    %7 = vector.shape_cast %6 : vector<16x128xf32> to vector<2x8x128xf32>
    %c0_6 = arith.constant 0 : index
    %c0_7 = arith.constant 0 : index
    %c0_8 = arith.constant 0 : index
    %8 = vector.load %arg1[%c0_6, %c0_7, %c0_8] : memref<7x2x128xf32, #tpu.memory_space<vmem>>, vector<7x2x128xf32>
    %c0_9 = arith.constant 0 : index
    %c0_10 = arith.constant 0 : index
    %c0_11 = arith.constant 0 : index
    %9 = vector.load %arg7[%c0_9, %c0_10, %c0_11] : memref<7x2x128xf32, #tpu.memory_space<vmem>>, vector<7x2x128xf32>
    tpu.vector_store %arg7[%c0_9, %c0_10, %c0_11], %8 {strides = array<i32>} : memref<7x2x128xf32, #tpu.memory_space<vmem>>, vector<7x2x128xf32>,
    %c0_12 = arith.constant 0 : index
    %c0_13 = arith.constant 0 : index
    %c0_14 = arith.constant 0 : index
    %10 = vector.load %arg5[%c0_12, %c0_13, %c0_14] : memref<2x256x128xf32, #tpu.memory_space<vmem>>, vector<1x256x128xf32>
    %11 = vector.shape_cast %10 : vector<1x256x128xf32> to vector<256x128xf32>
    %c0_15 = arith.constant 0 : index
    %c0_16 = arith.constant 0 : index
    %c0_17 = arith.constant 0 : index
    %12 = vector.load %arg6[%c0_15, %c0_16, %c0_17] : memref<2x1x128xf32, #tpu.memory_space<vmem>>, vector<1x1x128xf32>
    %13 = vector.shape_cast %12 : vector<1x1x128xf32> to vector<1x128xf32>
    %c0_18 = arith.constant 0 : index
    %c0_19 = arith.constant 0 : index
    %c0_20 = arith.constant 0 : index
    %14 = vector.load %arg2[%c0_18, %c0_19, %c0_20] : memref<2x2x128xf32, #tpu.memory_space<vmem>>, vector<1x2x128xf32>
    %15 = vector.shape_cast %14 : vector<1x2x128xf32> to vector<2x128xf32>
    %c0_i32 = arith.constant 0 : i32
    %16 = arith.index_cast %c0_i32 : i32 to index
    %c0_21 = arith.constant 0 : index
    %c0_22 = arith.constant 0 : index
    %17 = vector.load %arg7[%16, %c0_21, %c0_22] : memref<7x2x128xf32, #tpu.memory_space<vmem>>, vector<1x2x128xf32>
    %18 = vector.shape_cast %17 : vector<1x2x128xf32> to vector<2x128xf32>
    %19 = vector.shape_cast %15 : vector<2x128xf32> to vector<2x1x128xf32>
    %20 = vector.broadcast %19 : vector<2x1x128xf32> to vector<2x8x128xf32>
    %21 = arith.mulf %20, %0 : vector<2x8x128xf32>
    %cst_23 = arith.constant dense<0.000000e+00> : vector<2x8xf32>
    %22 = vector.multi_reduction <add>, %21, %cst_23 [2] : vector<2x8x128xf32> to vector<2x8xf32>
    %cst_24 = arith.constant dense<0xFF800000> : vector<2xf32>
    %23 = vector.multi_reduction <maximumf>, %22, %cst_24 [1] : vector<2x8xf32> to vector<2xf32>
    %24 = vector.shape_cast %23 : vector<2xf32> to vector<2x1xf32>
    %25 = vector.broadcast %24 : vector<2x1xf32> to vector<2x8xf32>
    %26 = arith.subf %22, %25 : vector<2x8xf32>
    %27 = math.exp %26 : vector<2x8xf32>
    %cst_25 = arith.constant dense<0.000000e+00> : vector<2xf32>
    %28 = vector.multi_reduction <add>, %27, %cst_25 [1] : vector<2x8xf32> to vector<2xf32>
    %29 = vector.shape_cast %28 : vector<2xf32> to vector<2x1xf32>
    %30 = tpu.reciprocal %29 {approx = true} : vector<2x1xf32> -> vector<2x1xf32>
    %31 = arith.mulf %29, %30 : vector<2x1xf32>
    %cst_26 = arith.constant 2.000000e+00 : f32
    %32 = vector.broadcast %cst_26 : f32 to vector<2x1xf32>
    %33 = arith.subf %32, %31 : vector<2x1xf32>
    %34 = arith.mulf %30, %33 : vector<2x1xf32>
    %35 = vector.broadcast %34 : vector<2x1xf32> to vector<2x8xf32>
    %36 = arith.mulf %27, %35 : vector<2x8xf32>
    %37 = vector.shape_cast %36 : vector<2x8xf32> to vector<2x8x1xf32>
    %38 = vector.broadcast %37 : vector<2x8x1xf32> to vector<2x8x128xf32>
    %39 = arith.mulf %38, %7 : vector<2x8x128xf32>
    %cst_27 = arith.constant dense<0.000000e+00> : vector<2x128xf32>
    %40 = vector.multi_reduction <add>, %39, %cst_27 [1] : vector<2x8x128xf32> to vector<2x128xf32>
    %41 = arith.addf %18, %40 : vector<2x128xf32>
    %42 = tpu.concatenate %41, %15 in 1 : vector<2x128xf32>, vector<2x128xf32> -> vector<2x256xf32>
    %cst_28 = arith.constant dense<0.000000e+00> : vector<2x128xf32>
    %43 = tpu.matmul %42, %11, %cst_28 {dimension_numbers = #tpu.dot_dimension_numbers<[1], [0], [0], [1], [0, 0, 1, 1], [], []>} : vector<2x256xf32>, vector<256x128xf32>, vector<2x128xf32> -> vector<2x128xf32>
    %44 = vector.broadcast %13 : vector<1x128xf32> to vector<2x128xf32>
    %45 = arith.addf %43, %44 : vector<2x128xf32>
    %46 = math.tanh %45 : vector<2x128xf32>
    %47 = arith.index_cast %c0_i32 : i32 to index
    %c0_29 = arith.constant 0 : index
    %c0_30 = arith.constant 0 : index
    %48 = vector.load %arg7[%47, %c0_29, %c0_30] : memref<7x2x128xf32, #tpu.memory_space<vmem>>, vector<1x2x128xf32>
    %49 = vector.shape_cast %48 : vector<1x2x128xf32> to vector<2x128xf32>
    %50 = vector.shape_cast %46 : vector<2x128xf32> to vector<1x2x128xf32>
    tpu.vector_store %arg7[%47, %c0_29, %c0_30], %50 {strides = array<i32>} : memref<7x2x128xf32, #tpu.memory_space<vmem>>, vector<1x2x128xf32>,
    %c1_i32 = arith.constant 1 : i32
    %51 = arith.index_cast %c1_i32 : i32 to index
    %c0_31 = arith.constant 0 : index
    %c0_32 = arith.constant 0 : index
    %52 = vector.load %arg7[%51, %c0_31, %c0_32] : memref<7x2x128xf32, #tpu.memory_space<vmem>>, vector<1x2x128xf32>
    %53 = vector.shape_cast %52 : vector<1x2x128xf32> to vector<2x128xf32>
    %54 = vector.shape_cast %46 : vector<2x128xf32> to vector<2x1x128xf32>
    %55 = vector.broadcast %54 : vector<2x1x128xf32> to vector<2x8x128xf32>
    %56 = arith.mulf %55, %0 : vector<2x8x128xf32>
    %cst_33 = arith.constant dense<0.000000e+00> : vector<2x8xf32>
    %57 = vector.multi_reduction <add>, %56, %cst_33 [2] : vector<2x8x128xf32> to vector<2x8xf32>
    %cst_34 = arith.constant dense<0xFF800000> : vector<2xf32>
    %58 = vector.multi_reduction <maximumf>, %57, %cst_34 [1] : vector<2x8xf32> to vector<2xf32>
    %59 = vector.shape_cast %58 : vector<2xf32> to vector<2x1xf32>
    %60 = vector.broadcast %59 : vector<2x1xf32> to vector<2x8xf32>
    %61 = arith.subf %57, %60 : vector<2x8xf32>
    %62 = math.exp %61 : vector<2x8xf32>
    %cst_35 = arith.constant dense<0.000000e+00> : vector<2xf32>
    %63 = vector.multi_reduction <add>, %62, %cst_35 [1] : vector<2x8xf32> to vector<2xf32>
    %64 = vector.shape_cast %63 : vector<2xf32> to vector<2x1xf32>
    %65 = tpu.reciprocal %64 {approx = true} : vector<2x1xf32> -> vector<2x1xf32>
    %66 = arith.mulf %64, %65 : vector<2x1xf32>
    %cst_36 = arith.constant 2.000000e+00 : f32
    %67 = vector.broadcast %cst_36 : f32 to vector<2x1xf32>
    %68 = arith.subf %67, %66 : vector<2x1xf32>
    %69 = arith.mulf %65, %68 : vector<2x1xf32>
    %70 = vector.broadcast %69 : vector<2x1xf32> to vector<2x8xf32>
    %71 = arith.mulf %62, %70 : vector<2x8xf32>
    %72 = vector.shape_cast %71 : vector<2x8xf32> to vector<2x8x1xf32>
    %73 = vector.broadcast %72 : vector<2x8x1xf32> to vector<2x8x128xf32>
    %74 = arith.mulf %73, %7 : vector<2x8x128xf32>
    %cst_37 = arith.constant dense<0.000000e+00> : vector<2x128xf32>
    %75 = vector.multi_reduction <add>, %74, %cst_37 [1] : vector<2x8x128xf32> to vector<2x128xf32>
    %76 = arith.addf %53, %75 : vector<2x128xf32>
    %77 = tpu.concatenate %76, %46 in 1 : vector<2x128xf32>, vector<2x128xf32> -> vector<2x256xf32>
    %cst_38 = arith.constant dense<0.000000e+00> : vector<2x128xf32>
    %78 = tpu.matmul %77, %11, %cst_38 {dimension_numbers = #tpu.dot_dimension_numbers<[1], [0], [0], [1], [0, 0, 1, 1], [], []>} : vector<2x256xf32>, vector<256x128xf32>, vector<2x128xf32> -> vector<2x128xf32>
    %79 = vector.broadcast %13 : vector<1x128xf32> to vector<2x128xf32>
    %80 = arith.addf %78, %79 : vector<2x128xf32>
    %81 = math.tanh %80 : vector<2x128xf32>
    %82 = arith.index_cast %c1_i32 : i32 to index
    %c0_39 = arith.constant 0 : index
    %c0_40 = arith.constant 0 : index
    %83 = vector.load %arg7[%82, %c0_39, %c0_40] : memref<7x2x128xf32, #tpu.memory_space<vmem>>, vector<1x2x128xf32>
    %84 = vector.shape_cast %83 : vector<1x2x128xf32> to vector<2x128xf32>
    %85 = vector.shape_cast %81 : vector<2x128xf32> to vector<1x2x128xf32>
    tpu.vector_store %arg7[%82, %c0_39, %c0_40], %85 {strides = array<i32>} : memref<7x2x128xf32, #tpu.memory_space<vmem>>, vector<1x2x128xf32>,
    %c2_i32 = arith.constant 2 : i32
    %86 = arith.index_cast %c2_i32 : i32 to index
    %c0_41 = arith.constant 0 : index
    %c0_42 = arith.constant 0 : index
    %87 = vector.load %arg7[%86, %c0_41, %c0_42] : memref<7x2x128xf32, #tpu.memory_space<vmem>>, vector<1x2x128xf32>
    %88 = vector.shape_cast %87 : vector<1x2x128xf32> to vector<2x128xf32>
    %89 = vector.shape_cast %81 : vector<2x128xf32> to vector<2x1x128xf32>
    %90 = vector.broadcast %89 : vector<2x1x128xf32> to vector<2x8x128xf32>
    %91 = arith.mulf %90, %0 : vector<2x8x128xf32>
    %cst_43 = arith.constant dense<0.000000e+00> : vector<2x8xf32>
    %92 = vector.multi_reduction <add>, %91, %cst_43 [2] : vector<2x8x128xf32> to vector<2x8xf32>
    %cst_44 = arith.constant dense<0xFF800000> : vector<2xf32>
    %93 = vector.multi_reduction <maximumf>, %92, %cst_44 [1] : vector<2x8xf32> to vector<2xf32>
    %94 = vector.shape_cast %93 : vector<2xf32> to vector<2x1xf32>
    %95 = vector.broadcast %94 : vector<2x1xf32> to vector<2x8xf32>
    %96 = arith.subf %92, %95 : vector<2x8xf32>
    %97 = math.exp %96 : vector<2x8xf32>
    %cst_45 = arith.constant dense<0.000000e+00> : vector<2xf32>
    %98 = vector.multi_reduction <add>, %97, %cst_45 [1] : vector<2x8xf32> to vector<2xf32>
    %99 = vector.shape_cast %98 : vector<2xf32> to vector<2x1xf32>
    %100 = tpu.reciprocal %99 {approx = true} : vector<2x1xf32> -> vector<2x1xf32>
    %101 = arith.mulf %99, %100 : vector<2x1xf32>
    %cst_46 = arith.constant 2.000000e+00 : f32
    %102 = vector.broadcast %cst_46 : f32 to vector<2x1xf32>
    %103 = arith.subf %102, %101 : vector<2x1xf32>
    %104 = arith.mulf %100, %103 : vector<2x1xf32>
    %105 = vector.broadcast %104 : vector<2x1xf32> to vector<2x8xf32>
    %106 = arith.mulf %97, %105 : vector<2x8xf32>
    %107 = vector.shape_cast %106 : vector<2x8xf32> to vector<2x8x1xf32>
    %108 = vector.broadcast %107 : vector<2x8x1xf32> to vector<2x8x128xf32>
    %109 = arith.mulf %108, %7 : vector<2x8x128xf32>
    %cst_47 = arith.constant dense<0.000000e+00> : vector<2x128xf32>
    %110 = vector.multi_reduction <add>, %109, %cst_47 [1] : vector<2x8x128xf32> to vector<2x128xf32>
    %111 = arith.addf %88, %110 : vector<2x128xf32>
    %112 = tpu.concatenate %111, %81 in 1 : vector<2x128xf32>, vector<2x128xf32> -> vector<2x256xf32>
    %cst_48 = arith.constant dense<0.000000e+00> : vector<2x128xf32>
    %113 = tpu.matmul %112, %11, %cst_48 {dimension_numbers = #tpu.dot_dimension_numbers<[1], [0], [0], [1], [0, 0, 1, 1], [], []>} : vector<2x256xf32>, vector<256x128xf32>, vector<2x128xf32> -> vector<2x128xf32>
    %114 = vector.broadcast %13 : vector<1x128xf32> to vector<2x128xf32>
    %115 = arith.addf %113, %114 : vector<2x128xf32>
    %116 = math.tanh %115 : vector<2x128xf32>
    %117 = arith.index_cast %c2_i32 : i32 to index
    %c0_49 = arith.constant 0 : index
    %c0_50 = arith.constant 0 : index
    %118 = vector.load %arg7[%117, %c0_49, %c0_50] : memref<7x2x128xf32, #tpu.memory_space<vmem>>, vector<1x2x128xf32>
    %119 = vector.shape_cast %118 : vector<1x2x128xf32> to vector<2x128xf32>
    %120 = vector.shape_cast %116 : vector<2x128xf32> to vector<1x2x128xf32>
    tpu.vector_store %arg7[%117, %c0_49, %c0_50], %120 {strides = array<i32>} : memref<7x2x128xf32, #tpu.memory_space<vmem>>, vector<1x2x128xf32>,
    %c3_i32 = arith.constant 3 : i32
    %121 = arith.index_cast %c3_i32 : i32 to index
    %c0_51 = arith.constant 0 : index
    %c0_52 = arith.constant 0 : index
    %122 = vector.load %arg7[%121, %c0_51, %c0_52] : memref<7x2x128xf32, #tpu.memory_space<vmem>>, vector<1x2x128xf32>
    %123 = vector.shape_cast %122 : vector<1x2x128xf32> to vector<2x128xf32>
    %124 = vector.shape_cast %116 : vector<2x128xf32> to vector<2x1x128xf32>
    %125 = vector.broadcast %124 : vector<2x1x128xf32> to vector<2x8x128xf32>
    %126 = arith.mulf %125, %0 : vector<2x8x128xf32>
    %cst_53 = arith.constant dense<0.000000e+00> : vector<2x8xf32>
    %127 = vector.multi_reduction <add>, %126, %cst_53 [2] : vector<2x8x128xf32> to vector<2x8xf32>
    %cst_54 = arith.constant dense<0xFF800000> : vector<2xf32>
    %128 = vector.multi_reduction <maximumf>, %127, %cst_54 [1] : vector<2x8xf32> to vector<2xf32>
    %129 = vector.shape_cast %128 : vector<2xf32> to vector<2x1xf32>
    %130 = vector.broadcast %129 : vector<2x1xf32> to vector<2x8xf32>
    %131 = arith.subf %127, %130 : vector<2x8xf32>
    %132 = math.exp %131 : vector<2x8xf32>
    %cst_55 = arith.constant dense<0.000000e+00> : vector<2xf32>
    %133 = vector.multi_reduction <add>, %132, %cst_55 [1] : vector<2x8xf32> to vector<2xf32>
    %134 = vector.shape_cast %133 : vector<2xf32> to vector<2x1xf32>
    %135 = tpu.reciprocal %134 {approx = true} : vector<2x1xf32> -> vector<2x1xf32>
    %136 = arith.mulf %134, %135 : vector<2x1xf32>
    %cst_56 = arith.constant 2.000000e+00 : f32
    %137 = vector.broadcast %cst_56 : f32 to vector<2x1xf32>
    %138 = arith.subf %137, %136 : vector<2x1xf32>
    %139 = arith.mulf %135, %138 : vector<2x1xf32>
    %140 = vector.broadcast %139 : vector<2x1xf32> to vector<2x8xf32>
    %141 = arith.mulf %132, %140 : vector<2x8xf32>
    %142 = vector.shape_cast %141 : vector<2x8xf32> to vector<2x8x1xf32>
    %143 = vector.broadcast %142 : vector<2x8x1xf32> to vector<2x8x128xf32>
    %144 = arith.mulf %143, %7 : vector<2x8x128xf32>
    %cst_57 = arith.constant dense<0.000000e+00> : vector<2x128xf32>
    %145 = vector.multi_reduction <add>, %144, %cst_57 [1] : vector<2x8x128xf32> to vector<2x128xf32>
    %146 = arith.addf %123, %145 : vector<2x128xf32>
    %147 = tpu.concatenate %146, %116 in 1 : vector<2x128xf32>, vector<2x128xf32> -> vector<2x256xf32>
    %cst_58 = arith.constant dense<0.000000e+00> : vector<2x128xf32>
    %148 = tpu.matmul %147, %11, %cst_58 {dimension_numbers = #tpu.dot_dimension_numbers<[1], [0], [0], [1], [0, 0, 1, 1], [], []>} : vector<2x256xf32>, vector<256x128xf32>, vector<2x128xf32> -> vector<2x128xf32>
    %149 = vector.broadcast %13 : vector<1x128xf32> to vector<2x128xf32>
    %150 = arith.addf %148, %149 : vector<2x128xf32>
    %151 = math.tanh %150 : vector<2x128xf32>
    %152 = arith.index_cast %c3_i32 : i32 to index
    %c0_59 = arith.constant 0 : index
    %c0_60 = arith.constant 0 : index
    %153 = vector.load %arg7[%152, %c0_59, %c0_60] : memref<7x2x128xf32, #tpu.memory_space<vmem>>, vector<1x2x128xf32>
    %154 = vector.shape_cast %153 : vector<1x2x128xf32> to vector<2x128xf32>
    %155 = vector.shape_cast %151 : vector<2x128xf32> to vector<1x2x128xf32>
    tpu.vector_store %arg7[%152, %c0_59, %c0_60], %155 {strides = array<i32>} : memref<7x2x128xf32, #tpu.memory_space<vmem>>, vector<1x2x128xf32>,
    %c4_i32 = arith.constant 4 : i32
    %156 = arith.index_cast %c4_i32 : i32 to index
    %c0_61 = arith.constant 0 : index
    %c0_62 = arith.constant 0 : index
    %157 = vector.load %arg7[%156, %c0_61, %c0_62] : memref<7x2x128xf32, #tpu.memory_space<vmem>>, vector<1x2x128xf32>
    %158 = vector.shape_cast %157 : vector<1x2x128xf32> to vector<2x128xf32>
    %159 = vector.shape_cast %151 : vector<2x128xf32> to vector<2x1x128xf32>
    %160 = vector.broadcast %159 : vector<2x1x128xf32> to vector<2x8x128xf32>
    %161 = arith.mulf %160, %0 : vector<2x8x128xf32>
    %cst_63 = arith.constant dense<0.000000e+00> : vector<2x8xf32>
    %162 = vector.multi_reduction <add>, %161, %cst_63 [2] : vector<2x8x128xf32> to vector<2x8xf32>
    %cst_64 = arith.constant dense<0xFF800000> : vector<2xf32>
    %163 = vector.multi_reduction <maximumf>, %162, %cst_64 [1] : vector<2x8xf32> to vector<2xf32>
    %164 = vector.shape_cast %163 : vector<2xf32> to vector<2x1xf32>
    %165 = vector.broadcast %164 : vector<2x1xf32> to vector<2x8xf32>
    %166 = arith.subf %162, %165 : vector<2x8xf32>
    %167 = math.exp %166 : vector<2x8xf32>
    %cst_65 = arith.constant dense<0.000000e+00> : vector<2xf32>
    %168 = vector.multi_reduction <add>, %167, %cst_65 [1] : vector<2x8xf32> to vector<2xf32>
    %169 = vector.shape_cast %168 : vector<2xf32> to vector<2x1xf32>
    %170 = tpu.reciprocal %169 {approx = true} : vector<2x1xf32> -> vector<2x1xf32>
    %171 = arith.mulf %169, %170 : vector<2x1xf32>
    %cst_66 = arith.constant 2.000000e+00 : f32
    %172 = vector.broadcast %cst_66 : f32 to vector<2x1xf32>
    %173 = arith.subf %172, %171 : vector<2x1xf32>
    %174 = arith.mulf %170, %173 : vector<2x1xf32>
    %175 = vector.broadcast %174 : vector<2x1xf32> to vector<2x8xf32>
    %176 = arith.mulf %167, %175 : vector<2x8xf32>
    %177 = vector.shape_cast %176 : vector<2x8xf32> to vector<2x8x1xf32>
    %178 = vector.broadcast %177 : vector<2x8x1xf32> to vector<2x8x128xf32>
    %179 = arith.mulf %178, %7 : vector<2x8x128xf32>
    %cst_67 = arith.constant dense<0.000000e+00> : vector<2x128xf32>
    %180 = vector.multi_reduction <add>, %179, %cst_67 [1] : vector<2x8x128xf32> to vector<2x128xf32>
    %181 = arith.addf %158, %180 : vector<2x128xf32>
    %182 = tpu.concatenate %181, %151 in 1 : vector<2x128xf32>, vector<2x128xf32> -> vector<2x256xf32>
    %cst_68 = arith.constant dense<0.000000e+00> : vector<2x128xf32>
    %183 = tpu.matmul %182, %11, %cst_68 {dimension_numbers = #tpu.dot_dimension_numbers<[1], [0], [0], [1], [0, 0, 1, 1], [], []>} : vector<2x256xf32>, vector<256x128xf32>, vector<2x128xf32> -> vector<2x128xf32>
    %184 = vector.broadcast %13 : vector<1x128xf32> to vector<2x128xf32>
    %185 = arith.addf %183, %184 : vector<2x128xf32>
    %186 = math.tanh %185 : vector<2x128xf32>
    %187 = arith.index_cast %c4_i32 : i32 to index
    %c0_69 = arith.constant 0 : index
    %c0_70 = arith.constant 0 : index
    %188 = vector.load %arg7[%187, %c0_69, %c0_70] : memref<7x2x128xf32, #tpu.memory_space<vmem>>, vector<1x2x128xf32>
    %189 = vector.shape_cast %188 : vector<1x2x128xf32> to vector<2x128xf32>
    %190 = vector.shape_cast %186 : vector<2x128xf32> to vector<1x2x128xf32>
    tpu.vector_store %arg7[%187, %c0_69, %c0_70], %190 {strides = array<i32>} : memref<7x2x128xf32, #tpu.memory_space<vmem>>, vector<1x2x128xf32>,
    %c5_i32 = arith.constant 5 : i32
    %191 = arith.index_cast %c5_i32 : i32 to index
    %c0_71 = arith.constant 0 : index
    %c0_72 = arith.constant 0 : index
    %192 = vector.load %arg7[%191, %c0_71, %c0_72] : memref<7x2x128xf32, #tpu.memory_space<vmem>>, vector<1x2x128xf32>
    %193 = vector.shape_cast %192 : vector<1x2x128xf32> to vector<2x128xf32>
    %194 = vector.shape_cast %186 : vector<2x128xf32> to vector<2x1x128xf32>
    %195 = vector.broadcast %194 : vector<2x1x128xf32> to vector<2x8x128xf32>
    %196 = arith.mulf %195, %0 : vector<2x8x128xf32>
    %cst_73 = arith.constant dense<0.000000e+00> : vector<2x8xf32>
    %197 = vector.multi_reduction <add>, %196, %cst_73 [2] : vector<2x8x128xf32> to vector<2x8xf32>
    %cst_74 = arith.constant dense<0xFF800000> : vector<2xf32>
    %198 = vector.multi_reduction <maximumf>, %197, %cst_74 [1] : vector<2x8xf32> to vector<2xf32>
    %199 = vector.shape_cast %198 : vector<2xf32> to vector<2x1xf32>
    %200 = vector.broadcast %199 : vector<2x1xf32> to vector<2x8xf32>
    %201 = arith.subf %197, %200 : vector<2x8xf32>
    %202 = math.exp %201 : vector<2x8xf32>
    %cst_75 = arith.constant dense<0.000000e+00> : vector<2xf32>
    %203 = vector.multi_reduction <add>, %202, %cst_75 [1] : vector<2x8xf32> to vector<2xf32>
    %204 = vector.shape_cast %203 : vector<2xf32> to vector<2x1xf32>
    %205 = tpu.reciprocal %204 {approx = true} : vector<2x1xf32> -> vector<2x1xf32>
    %206 = arith.mulf %204, %205 : vector<2x1xf32>
    %cst_76 = arith.constant 2.000000e+00 : f32
    %207 = vector.broadcast %cst_76 : f32 to vector<2x1xf32>
    %208 = arith.subf %207, %206 : vector<2x1xf32>
    %209 = arith.mulf %205, %208 : vector<2x1xf32>
    %210 = vector.broadcast %209 : vector<2x1xf32> to vector<2x8xf32>
    %211 = arith.mulf %202, %210 : vector<2x8xf32>
    %212 = vector.shape_cast %211 : vector<2x8xf32> to vector<2x8x1xf32>
    %213 = vector.broadcast %212 : vector<2x8x1xf32> to vector<2x8x128xf32>
    %214 = arith.mulf %213, %7 : vector<2x8x128xf32>
    %cst_77 = arith.constant dense<0.000000e+00> : vector<2x128xf32>
    %215 = vector.multi_reduction <add>, %214, %cst_77 [1] : vector<2x8x128xf32> to vector<2x128xf32>
    %216 = arith.addf %193, %215 : vector<2x128xf32>
    %217 = tpu.concatenate %216, %186 in 1 : vector<2x128xf32>, vector<2x128xf32> -> vector<2x256xf32>
    %cst_78 = arith.constant dense<0.000000e+00> : vector<2x128xf32>
    %218 = tpu.matmul %217, %11, %cst_78 {dimension_numbers = #tpu.dot_dimension_numbers<[1], [0], [0], [1], [0, 0, 1, 1], [], []>} : vector<2x256xf32>, vector<256x128xf32>, vector<2x128xf32> -> vector<2x128xf32>
    %219 = vector.broadcast %13 : vector<1x128xf32> to vector<2x128xf32>
    %220 = arith.addf %218, %219 : vector<2x128xf32>
    %221 = math.tanh %220 : vector<2x128xf32>
    %222 = arith.index_cast %c5_i32 : i32 to index
    %c0_79 = arith.constant 0 : index
    %c0_80 = arith.constant 0 : index
    %223 = vector.load %arg7[%222, %c0_79, %c0_80] : memref<7x2x128xf32, #tpu.memory_space<vmem>>, vector<1x2x128xf32>
    %224 = vector.shape_cast %223 : vector<1x2x128xf32> to vector<2x128xf32>
    %225 = vector.shape_cast %221 : vector<2x128xf32> to vector<1x2x128xf32>
    tpu.vector_store %arg7[%222, %c0_79, %c0_80], %225 {strides = array<i32>} : memref<7x2x128xf32, #tpu.memory_space<vmem>>, vector<1x2x128xf32>,
    %c6_i32 = arith.constant 6 : i32
    %226 = arith.index_cast %c6_i32 : i32 to index
    %c0_81 = arith.constant 0 : index
    %c0_82 = arith.constant 0 : index
    %227 = vector.load %arg7[%226, %c0_81, %c0_82] : memref<7x2x128xf32, #tpu.memory_space<vmem>>, vector<1x2x128xf32>
    %228 = vector.shape_cast %227 : vector<1x2x128xf32> to vector<2x128xf32>
    %229 = vector.shape_cast %221 : vector<2x128xf32> to vector<2x1x128xf32>
    %230 = vector.broadcast %229 : vector<2x1x128xf32> to vector<2x8x128xf32>
    %231 = arith.mulf %230, %0 : vector<2x8x128xf32>
    %cst_83 = arith.constant dense<0.000000e+00> : vector<2x8xf32>
    %232 = vector.multi_reduction <add>, %231, %cst_83 [2] : vector<2x8x128xf32> to vector<2x8xf32>
    %cst_84 = arith.constant dense<0xFF800000> : vector<2xf32>
    %233 = vector.multi_reduction <maximumf>, %232, %cst_84 [1] : vector<2x8xf32> to vector<2xf32>
    %234 = vector.shape_cast %233 : vector<2xf32> to vector<2x1xf32>
    %235 = vector.broadcast %234 : vector<2x1xf32> to vector<2x8xf32>
    %236 = arith.subf %232, %235 : vector<2x8xf32>
    %237 = math.exp %236 : vector<2x8xf32>
    %cst_85 = arith.constant dense<0.000000e+00> : vector<2xf32>
    %238 = vector.multi_reduction <add>, %237, %cst_85 [1] : vector<2x8xf32> to vector<2xf32>
    %239 = vector.shape_cast %238 : vector<2xf32> to vector<2x1xf32>
    %240 = tpu.reciprocal %239 {approx = true} : vector<2x1xf32> -> vector<2x1xf32>
    %241 = arith.mulf %239, %240 : vector<2x1xf32>
    %cst_86 = arith.constant 2.000000e+00 : f32
    %242 = vector.broadcast %cst_86 : f32 to vector<2x1xf32>
    %243 = arith.subf %242, %241 : vector<2x1xf32>
    %244 = arith.mulf %240, %243 : vector<2x1xf32>
    %245 = vector.broadcast %244 : vector<2x1xf32> to vector<2x8xf32>
    %246 = arith.mulf %237, %245 : vector<2x8xf32>
    %247 = vector.shape_cast %246 : vector<2x8xf32> to vector<2x8x1xf32>
    %248 = vector.broadcast %247 : vector<2x8x1xf32> to vector<2x8x128xf32>
    %249 = arith.mulf %248, %7 : vector<2x8x128xf32>
    %cst_87 = arith.constant dense<0.000000e+00> : vector<2x128xf32>
    %250 = vector.multi_reduction <add>, %249, %cst_87 [1] : vector<2x8x128xf32> to vector<2x128xf32>
    %251 = arith.addf %228, %250 : vector<2x128xf32>
    %252 = tpu.concatenate %251, %221 in 1 : vector<2x128xf32>, vector<2x128xf32> -> vector<2x256xf32>
    %cst_88 = arith.constant dense<0.000000e+00> : vector<2x128xf32>
    %253 = tpu.matmul %252, %11, %cst_88 {dimension_numbers = #tpu.dot_dimension_numbers<[1], [0], [0], [1], [0, 0, 1, 1], [], []>} : vector<2x256xf32>, vector<256x128xf32>, vector<2x128xf32> -> vector<2x128xf32>
    %254 = vector.broadcast %13 : vector<1x128xf32> to vector<2x128xf32>
    %255 = arith.addf %253, %254 : vector<2x128xf32>
    %256 = math.tanh %255 : vector<2x128xf32>
    %257 = arith.index_cast %c6_i32 : i32 to index
    %c0_89 = arith.constant 0 : index
    %c0_90 = arith.constant 0 : index
    %258 = vector.load %arg7[%257, %c0_89, %c0_90] : memref<7x2x128xf32, #tpu.memory_space<vmem>>, vector<1x2x128xf32>
    %259 = vector.shape_cast %258 : vector<1x2x128xf32> to vector<2x128xf32>
    %260 = vector.shape_cast %256 : vector<2x128xf32> to vector<1x2x128xf32>
    tpu.vector_store %arg7[%257, %c0_89, %c0_90], %260 {strides = array<i32>} : memref<7x2x128xf32, #tpu.memory_space<vmem>>, vector<1x2x128xf32>,
    %c7_i32 = arith.constant 7 : i32
    %c1 = arith.constant 1 : index
    %c0_91 = arith.constant 0 : index
    %c0_92 = arith.constant 0 : index
    %261 = vector.load %arg5[%c1, %c0_91, %c0_92] : memref<2x256x128xf32, #tpu.memory_space<vmem>>, vector<1x256x128xf32>
    %262 = vector.shape_cast %261 : vector<1x256x128xf32> to vector<256x128xf32>
    %c1_93 = arith.constant 1 : index
    %c0_94 = arith.constant 0 : index
    %c0_95 = arith.constant 0 : index
    %263 = vector.load %arg6[%c1_93, %c0_94, %c0_95] : memref<2x1x128xf32, #tpu.memory_space<vmem>>, vector<1x1x128xf32>
    %264 = vector.shape_cast %263 : vector<1x1x128xf32> to vector<1x128xf32>
    %c1_96 = arith.constant 1 : index
    %c0_97 = arith.constant 0 : index
    %c0_98 = arith.constant 0 : index
    %265 = vector.load %arg2[%c1_96, %c0_97, %c0_98] : memref<2x2x128xf32, #tpu.memory_space<vmem>>, vector<1x2x128xf32>
    %266 = vector.shape_cast %265 : vector<1x2x128xf32> to vector<2x128xf32>
    %c0_i32_99 = arith.constant 0 : i32
    %267 = arith.index_cast %c0_i32_99 : i32 to index
    %c0_100 = arith.constant 0 : index
    %c0_101 = arith.constant 0 : index
    %268 = vector.load %arg7[%267, %c0_100, %c0_101] : memref<7x2x128xf32, #tpu.memory_space<vmem>>, vector<1x2x128xf32>
    %269 = vector.shape_cast %268 : vector<1x2x128xf32> to vector<2x128xf32>
    %270 = vector.shape_cast %266 : vector<2x128xf32> to vector<2x1x128xf32>
    %271 = vector.broadcast %270 : vector<2x1x128xf32> to vector<2x8x128xf32>
    %272 = arith.mulf %271, %0 : vector<2x8x128xf32>
    %cst_102 = arith.constant dense<0.000000e+00> : vector<2x8xf32>
    %273 = vector.multi_reduction <add>, %272, %cst_102 [2] : vector<2x8x128xf32> to vector<2x8xf32>
    %cst_103 = arith.constant dense<0xFF800000> : vector<2xf32>
    %274 = vector.multi_reduction <maximumf>, %273, %cst_103 [1] : vector<2x8xf32> to vector<2xf32>
    %275 = vector.shape_cast %274 : vector<2xf32> to vector<2x1xf32>
    %276 = vector.broadcast %275 : vector<2x1xf32> to vector<2x8xf32>
    %277 = arith.subf %273, %276 : vector<2x8xf32>
    %278 = math.exp %277 : vector<2x8xf32>
    %cst_104 = arith.constant dense<0.000000e+00> : vector<2xf32>
    %279 = vector.multi_reduction <add>, %278, %cst_104 [1] : vector<2x8xf32> to vector<2xf32>
    %280 = vector.shape_cast %279 : vector<2xf32> to vector<2x1xf32>
    %281 = tpu.reciprocal %280 {approx = true} : vector<2x1xf32> -> vector<2x1xf32>
    %282 = arith.mulf %280, %281 : vector<2x1xf32>
    %cst_105 = arith.constant 2.000000e+00 : f32
    %283 = vector.broadcast %cst_105 : f32 to vector<2x1xf32>
    %284 = arith.subf %283, %282 : vector<2x1xf32>
    %285 = arith.mulf %281, %284 : vector<2x1xf32>
    %286 = vector.broadcast %285 : vector<2x1xf32> to vector<2x8xf32>
    %287 = arith.mulf %278, %286 : vector<2x8xf32>
    %288 = vector.shape_cast %287 : vector<2x8xf32> to vector<2x8x1xf32>
    %289 = vector.broadcast %288 : vector<2x8x1xf32> to vector<2x8x128xf32>
    %290 = arith.mulf %289, %7 : vector<2x8x128xf32>
    %cst_106 = arith.constant dense<0.000000e+00> : vector<2x128xf32>
    %291 = vector.multi_reduction <add>, %290, %cst_106 [1] : vector<2x8x128xf32> to vector<2x128xf32>
    %292 = arith.addf %269, %291 : vector<2x128xf32>
    %293 = tpu.concatenate %292, %266 in 1 : vector<2x128xf32>, vector<2x128xf32> -> vector<2x256xf32>
    %cst_107 = arith.constant dense<0.000000e+00> : vector<2x128xf32>
    %294 = tpu.matmul %293, %262, %cst_107 {dimension_numbers = #tpu.dot_dimension_numbers<[1], [0], [0], [1], [0, 0, 1, 1], [], []>} : vector<2x256xf32>, vector<256x128xf32>, vector<2x128xf32> -> vector<2x128xf32>
    %295 = vector.broadcast %264 : vector<1x128xf32> to vector<2x128xf32>
    %296 = arith.addf %294, %295 : vector<2x128xf32>
    %297 = math.tanh %296 : vector<2x128xf32>
    %298 = arith.index_cast %c0_i32_99 : i32 to index
    %c0_108 = arith.constant 0 : index
    %c0_109 = arith.constant 0 : index
    %299 = vector.load %arg7[%298, %c0_108, %c0_109] : memref<7x2x128xf32, #tpu.memory_space<vmem>>, vector<1x2x128xf32>
    %300 = vector.shape_cast %299 : vector<1x2x128xf32> to vector<2x128xf32>
    %301 = vector.shape_cast %297 : vector<2x128xf32> to vector<1x2x128xf32>
    tpu.vector_store %arg7[%298, %c0_108, %c0_109], %301 {strides = array<i32>} : memref<7x2x128xf32, #tpu.memory_space<vmem>>, vector<1x2x128xf32>,
    %c1_i32_110 = arith.constant 1 : i32
    %302 = arith.index_cast %c1_i32_110 : i32 to index
    %c0_111 = arith.constant 0 : index
    %c0_112 = arith.constant 0 : index
    %303 = vector.load %arg7[%302, %c0_111, %c0_112] : memref<7x2x128xf32, #tpu.memory_space<vmem>>, vector<1x2x128xf32>
    %304 = vector.shape_cast %303 : vector<1x2x128xf32> to vector<2x128xf32>
    %305 = vector.shape_cast %297 : vector<2x128xf32> to vector<2x1x128xf32>
    %306 = vector.broadcast %305 : vector<2x1x128xf32> to vector<2x8x128xf32>
    %307 = arith.mulf %306, %0 : vector<2x8x128xf32>
    %cst_113 = arith.constant dense<0.000000e+00> : vector<2x8xf32>
    %308 = vector.multi_reduction <add>, %307, %cst_113 [2] : vector<2x8x128xf32> to vector<2x8xf32>
    %cst_114 = arith.constant dense<0xFF800000> : vector<2xf32>
    %309 = vector.multi_reduction <maximumf>, %308, %cst_114 [1] : vector<2x8xf32> to vector<2xf32>
    %310 = vector.shape_cast %309 : vector<2xf32> to vector<2x1xf32>
    %311 = vector.broadcast %310 : vector<2x1xf32> to vector<2x8xf32>
    %312 = arith.subf %308, %311 : vector<2x8xf32>
    %313 = math.exp %312 : vector<2x8xf32>
    %cst_115 = arith.constant dense<0.000000e+00> : vector<2xf32>
    %314 = vector.multi_reduction <add>, %313, %cst_115 [1] : vector<2x8xf32> to vector<2xf32>
    %315 = vector.shape_cast %314 : vector<2xf32> to vector<2x1xf32>
    %316 = tpu.reciprocal %315 {approx = true} : vector<2x1xf32> -> vector<2x1xf32>
    %317 = arith.mulf %315, %316 : vector<2x1xf32>
    %cst_116 = arith.constant 2.000000e+00 : f32
    %318 = vector.broadcast %cst_116 : f32 to vector<2x1xf32>
    %319 = arith.subf %318, %317 : vector<2x1xf32>
    %320 = arith.mulf %316, %319 : vector<2x1xf32>
    %321 = vector.broadcast %320 : vector<2x1xf32> to vector<2x8xf32>
    %322 = arith.mulf %313, %321 : vector<2x8xf32>
    %323 = vector.shape_cast %322 : vector<2x8xf32> to vector<2x8x1xf32>
    %324 = vector.broadcast %323 : vector<2x8x1xf32> to vector<2x8x128xf32>
    %325 = arith.mulf %324, %7 : vector<2x8x128xf32>
    %cst_117 = arith.constant dense<0.000000e+00> : vector<2x128xf32>
    %326 = vector.multi_reduction <add>, %325, %cst_117 [1] : vector<2x8x128xf32> to vector<2x128xf32>
    %327 = arith.addf %304, %326 : vector<2x128xf32>
    %328 = tpu.concatenate %327, %297 in 1 : vector<2x128xf32>, vector<2x128xf32> -> vector<2x256xf32>
    %cst_118 = arith.constant dense<0.000000e+00> : vector<2x128xf32>
    %329 = tpu.matmul %328, %262, %cst_118 {dimension_numbers = #tpu.dot_dimension_numbers<[1], [0], [0], [1], [0, 0, 1, 1], [], []>} : vector<2x256xf32>, vector<256x128xf32>, vector<2x128xf32> -> vector<2x128xf32>
    %330 = vector.broadcast %264 : vector<1x128xf32> to vector<2x128xf32>
    %331 = arith.addf %329, %330 : vector<2x128xf32>
    %332 = math.tanh %331 : vector<2x128xf32>
    %333 = arith.index_cast %c1_i32_110 : i32 to index
    %c0_119 = arith.constant 0 : index
    %c0_120 = arith.constant 0 : index
    %334 = vector.load %arg7[%333, %c0_119, %c0_120] : memref<7x2x128xf32, #tpu.memory_space<vmem>>, vector<1x2x128xf32>
    %335 = vector.shape_cast %334 : vector<1x2x128xf32> to vector<2x128xf32>
    %336 = vector.shape_cast %332 : vector<2x128xf32> to vector<1x2x128xf32>
    tpu.vector_store %arg7[%333, %c0_119, %c0_120], %336 {strides = array<i32>} : memref<7x2x128xf32, #tpu.memory_space<vmem>>, vector<1x2x128xf32>,
    %c2_i32_121 = arith.constant 2 : i32
    %337 = arith.index_cast %c2_i32_121 : i32 to index
    %c0_122 = arith.constant 0 : index
    %c0_123 = arith.constant 0 : index
    %338 = vector.load %arg7[%337, %c0_122, %c0_123] : memref<7x2x128xf32, #tpu.memory_space<vmem>>, vector<1x2x128xf32>
    %339 = vector.shape_cast %338 : vector<1x2x128xf32> to vector<2x128xf32>
    %340 = vector.shape_cast %332 : vector<2x128xf32> to vector<2x1x128xf32>
    %341 = vector.broadcast %340 : vector<2x1x128xf32> to vector<2x8x128xf32>
    %342 = arith.mulf %341, %0 : vector<2x8x128xf32>
    %cst_124 = arith.constant dense<0.000000e+00> : vector<2x8xf32>
    %343 = vector.multi_reduction <add>, %342, %cst_124 [2] : vector<2x8x128xf32> to vector<2x8xf32>
    %cst_125 = arith.constant dense<0xFF800000> : vector<2xf32>
    %344 = vector.multi_reduction <maximumf>, %343, %cst_125 [1] : vector<2x8xf32> to vector<2xf32>
    %345 = vector.shape_cast %344 : vector<2xf32> to vector<2x1xf32>
    %346 = vector.broadcast %345 : vector<2x1xf32> to vector<2x8xf32>
    %347 = arith.subf %343, %346 : vector<2x8xf32>
    %348 = math.exp %347 : vector<2x8xf32>
    %cst_126 = arith.constant dense<0.000000e+00> : vector<2xf32>
    %349 = vector.multi_reduction <add>, %348, %cst_126 [1] : vector<2x8xf32> to vector<2xf32>
    %350 = vector.shape_cast %349 : vector<2xf32> to vector<2x1xf32>
    %351 = tpu.reciprocal %350 {approx = true} : vector<2x1xf32> -> vector<2x1xf32>
    %352 = arith.mulf %350, %351 : vector<2x1xf32>
    %cst_127 = arith.constant 2.000000e+00 : f32
    %353 = vector.broadcast %cst_127 : f32 to vector<2x1xf32>
    %354 = arith.subf %353, %352 : vector<2x1xf32>
    %355 = arith.mulf %351, %354 : vector<2x1xf32>
    %356 = vector.broadcast %355 : vector<2x1xf32> to vector<2x8xf32>
    %357 = arith.mulf %348, %356 : vector<2x8xf32>
    %358 = vector.shape_cast %357 : vector<2x8xf32> to vector<2x8x1xf32>
    %359 = vector.broadcast %358 : vector<2x8x1xf32> to vector<2x8x128xf32>
    %360 = arith.mulf %359, %7 : vector<2x8x128xf32>
    %cst_128 = arith.constant dense<0.000000e+00> : vector<2x128xf32>
    %361 = vector.multi_reduction <add>, %360, %cst_128 [1] : vector<2x8x128xf32> to vector<2x128xf32>
    %362 = arith.addf %339, %361 : vector<2x128xf32>
    %363 = tpu.concatenate %362, %332 in 1 : vector<2x128xf32>, vector<2x128xf32> -> vector<2x256xf32>
    %cst_129 = arith.constant dense<0.000000e+00> : vector<2x128xf32>
    %364 = tpu.matmul %363, %262, %cst_129 {dimension_numbers = #tpu.dot_dimension_numbers<[1], [0], [0], [1], [0, 0, 1, 1], [], []>} : vector<2x256xf32>, vector<256x128xf32>, vector<2x128xf32> -> vector<2x128xf32>
    %365 = vector.broadcast %264 : vector<1x128xf32> to vector<2x128xf32>
    %366 = arith.addf %364, %365 : vector<2x128xf32>
    %367 = math.tanh %366 : vector<2x128xf32>
    %368 = arith.index_cast %c2_i32_121 : i32 to index
    %c0_130 = arith.constant 0 : index
    %c0_131 = arith.constant 0 : index
    %369 = vector.load %arg7[%368, %c0_130, %c0_131] : memref<7x2x128xf32, #tpu.memory_space<vmem>>, vector<1x2x128xf32>
    %370 = vector.shape_cast %369 : vector<1x2x128xf32> to vector<2x128xf32>
    %371 = vector.shape_cast %367 : vector<2x128xf32> to vector<1x2x128xf32>
    tpu.vector_store %arg7[%368, %c0_130, %c0_131], %371 {strides = array<i32>} : memref<7x2x128xf32, #tpu.memory_space<vmem>>, vector<1x2x128xf32>,
    %c3_i32_132 = arith.constant 3 : i32
    %372 = arith.index_cast %c3_i32_132 : i32 to index
    %c0_133 = arith.constant 0 : index
    %c0_134 = arith.constant 0 : index
    %373 = vector.load %arg7[%372, %c0_133, %c0_134] : memref<7x2x128xf32, #tpu.memory_space<vmem>>, vector<1x2x128xf32>
    %374 = vector.shape_cast %373 : vector<1x2x128xf32> to vector<2x128xf32>
    %375 = vector.shape_cast %367 : vector<2x128xf32> to vector<2x1x128xf32>
    %376 = vector.broadcast %375 : vector<2x1x128xf32> to vector<2x8x128xf32>
    %377 = arith.mulf %376, %0 : vector<2x8x128xf32>
    %cst_135 = arith.constant dense<0.000000e+00> : vector<2x8xf32>
    %378 = vector.multi_reduction <add>, %377, %cst_135 [2] : vector<2x8x128xf32> to vector<2x8xf32>
    %cst_136 = arith.constant dense<0xFF800000> : vector<2xf32>
    %379 = vector.multi_reduction <maximumf>, %378, %cst_136 [1] : vector<2x8xf32> to vector<2xf32>
    %380 = vector.shape_cast %379 : vector<2xf32> to vector<2x1xf32>
    %381 = vector.broadcast %380 : vector<2x1xf32> to vector<2x8xf32>
    %382 = arith.subf %378, %381 : vector<2x8xf32>
    %383 = math.exp %382 : vector<2x8xf32>
    %cst_137 = arith.constant dense<0.000000e+00> : vector<2xf32>
    %384 = vector.multi_reduction <add>, %383, %cst_137 [1] : vector<2x8xf32> to vector<2xf32>
    %385 = vector.shape_cast %384 : vector<2xf32> to vector<2x1xf32>
    %386 = tpu.reciprocal %385 {approx = true} : vector<2x1xf32> -> vector<2x1xf32>
    %387 = arith.mulf %385, %386 : vector<2x1xf32>
    %cst_138 = arith.constant 2.000000e+00 : f32
    %388 = vector.broadcast %cst_138 : f32 to vector<2x1xf32>
    %389 = arith.subf %388, %387 : vector<2x1xf32>
    %390 = arith.mulf %386, %389 : vector<2x1xf32>
    %391 = vector.broadcast %390 : vector<2x1xf32> to vector<2x8xf32>
    %392 = arith.mulf %383, %391 : vector<2x8xf32>
    %393 = vector.shape_cast %392 : vector<2x8xf32> to vector<2x8x1xf32>
    %394 = vector.broadcast %393 : vector<2x8x1xf32> to vector<2x8x128xf32>
    %395 = arith.mulf %394, %7 : vector<2x8x128xf32>
    %cst_139 = arith.constant dense<0.000000e+00> : vector<2x128xf32>
    %396 = vector.multi_reduction <add>, %395, %cst_139 [1] : vector<2x8x128xf32> to vector<2x128xf32>
    %397 = arith.addf %374, %396 : vector<2x128xf32>
    %398 = tpu.concatenate %397, %367 in 1 : vector<2x128xf32>, vector<2x128xf32> -> vector<2x256xf32>
    %cst_140 = arith.constant dense<0.000000e+00> : vector<2x128xf32>
    %399 = tpu.matmul %398, %262, %cst_140 {dimension_numbers = #tpu.dot_dimension_numbers<[1], [0], [0], [1], [0, 0, 1, 1], [], []>} : vector<2x256xf32>, vector<256x128xf32>, vector<2x128xf32> -> vector<2x128xf32>
    %400 = vector.broadcast %264 : vector<1x128xf32> to vector<2x128xf32>
    %401 = arith.addf %399, %400 : vector<2x128xf32>
    %402 = math.tanh %401 : vector<2x128xf32>
    %403 = arith.index_cast %c3_i32_132 : i32 to index
    %c0_141 = arith.constant 0 : index
    %c0_142 = arith.constant 0 : index
    %404 = vector.load %arg7[%403, %c0_141, %c0_142] : memref<7x2x128xf32, #tpu.memory_space<vmem>>, vector<1x2x128xf32>
    %405 = vector.shape_cast %404 : vector<1x2x128xf32> to vector<2x128xf32>
    %406 = vector.shape_cast %402 : vector<2x128xf32> to vector<1x2x128xf32>
    tpu.vector_store %arg7[%403, %c0_141, %c0_142], %406 {strides = array<i32>} : memref<7x2x128xf32, #tpu.memory_space<vmem>>, vector<1x2x128xf32>,
    %c4_i32_143 = arith.constant 4 : i32
    %407 = arith.index_cast %c4_i32_143 : i32 to index
    %c0_144 = arith.constant 0 : index
    %c0_145 = arith.constant 0 : index
    %408 = vector.load %arg7[%407, %c0_144, %c0_145] : memref<7x2x128xf32, #tpu.memory_space<vmem>>, vector<1x2x128xf32>
    %409 = vector.shape_cast %408 : vector<1x2x128xf32> to vector<2x128xf32>
    %410 = vector.shape_cast %402 : vector<2x128xf32> to vector<2x1x128xf32>
    %411 = vector.broadcast %410 : vector<2x1x128xf32> to vector<2x8x128xf32>
    %412 = arith.mulf %411, %0 : vector<2x8x128xf32>
    %cst_146 = arith.constant dense<0.000000e+00> : vector<2x8xf32>
    %413 = vector.multi_reduction <add>, %412, %cst_146 [2] : vector<2x8x128xf32> to vector<2x8xf32>
    %cst_147 = arith.constant dense<0xFF800000> : vector<2xf32>
    %414 = vector.multi_reduction <maximumf>, %413, %cst_147 [1] : vector<2x8xf32> to vector<2xf32>
    %415 = vector.shape_cast %414 : vector<2xf32> to vector<2x1xf32>
    %416 = vector.broadcast %415 : vector<2x1xf32> to vector<2x8xf32>
    %417 = arith.subf %413, %416 : vector<2x8xf32>
    %418 = math.exp %417 : vector<2x8xf32>
    %cst_148 = arith.constant dense<0.000000e+00> : vector<2xf32>
    %419 = vector.multi_reduction <add>, %418, %cst_148 [1] : vector<2x8xf32> to vector<2xf32>
    %420 = vector.shape_cast %419 : vector<2xf32> to vector<2x1xf32>
    %421 = tpu.reciprocal %420 {approx = true} : vector<2x1xf32> -> vector<2x1xf32>
    %422 = arith.mulf %420, %421 : vector<2x1xf32>
    %cst_149 = arith.constant 2.000000e+00 : f32
    %423 = vector.broadcast %cst_149 : f32 to vector<2x1xf32>
    %424 = arith.subf %423, %422 : vector<2x1xf32>
    %425 = arith.mulf %421, %424 : vector<2x1xf32>
    %426 = vector.broadcast %425 : vector<2x1xf32> to vector<2x8xf32>
    %427 = arith.mulf %418, %426 : vector<2x8xf32>
    %428 = vector.shape_cast %427 : vector<2x8xf32> to vector<2x8x1xf32>
    %429 = vector.broadcast %428 : vector<2x8x1xf32> to vector<2x8x128xf32>
    %430 = arith.mulf %429, %7 : vector<2x8x128xf32>
    %cst_150 = arith.constant dense<0.000000e+00> : vector<2x128xf32>
    %431 = vector.multi_reduction <add>, %430, %cst_150 [1] : vector<2x8x128xf32> to vector<2x128xf32>
    %432 = arith.addf %409, %431 : vector<2x128xf32>
    %433 = tpu.concatenate %432, %402 in 1 : vector<2x128xf32>, vector<2x128xf32> -> vector<2x256xf32>
    %cst_151 = arith.constant dense<0.000000e+00> : vector<2x128xf32>
    %434 = tpu.matmul %433, %262, %cst_151 {dimension_numbers = #tpu.dot_dimension_numbers<[1], [0], [0], [1], [0, 0, 1, 1], [], []>} : vector<2x256xf32>, vector<256x128xf32>, vector<2x128xf32> -> vector<2x128xf32>
    %435 = vector.broadcast %264 : vector<1x128xf32> to vector<2x128xf32>
    %436 = arith.addf %434, %435 : vector<2x128xf32>
    %437 = math.tanh %436 : vector<2x128xf32>
    %438 = arith.index_cast %c4_i32_143 : i32 to index
    %c0_152 = arith.constant 0 : index
    %c0_153 = arith.constant 0 : index
    %439 = vector.load %arg7[%438, %c0_152, %c0_153] : memref<7x2x128xf32, #tpu.memory_space<vmem>>, vector<1x2x128xf32>
    %440 = vector.shape_cast %439 : vector<1x2x128xf32> to vector<2x128xf32>
    %441 = vector.shape_cast %437 : vector<2x128xf32> to vector<1x2x128xf32>
    tpu.vector_store %arg7[%438, %c0_152, %c0_153], %441 {strides = array<i32>} : memref<7x2x128xf32, #tpu.memory_space<vmem>>, vector<1x2x128xf32>,
    %c5_i32_154 = arith.constant 5 : i32
    %442 = arith.index_cast %c5_i32_154 : i32 to index
    %c0_155 = arith.constant 0 : index
    %c0_156 = arith.constant 0 : index
    %443 = vector.load %arg7[%442, %c0_155, %c0_156] : memref<7x2x128xf32, #tpu.memory_space<vmem>>, vector<1x2x128xf32>
    %444 = vector.shape_cast %443 : vector<1x2x128xf32> to vector<2x128xf32>
    %445 = vector.shape_cast %437 : vector<2x128xf32> to vector<2x1x128xf32>
    %446 = vector.broadcast %445 : vector<2x1x128xf32> to vector<2x8x128xf32>
    %447 = arith.mulf %446, %0 : vector<2x8x128xf32>
    %cst_157 = arith.constant dense<0.000000e+00> : vector<2x8xf32>
    %448 = vector.multi_reduction <add>, %447, %cst_157 [2] : vector<2x8x128xf32> to vector<2x8xf32>
    %cst_158 = arith.constant dense<0xFF800000> : vector<2xf32>
    %449 = vector.multi_reduction <maximumf>, %448, %cst_158 [1] : vector<2x8xf32> to vector<2xf32>
    %450 = vector.shape_cast %449 : vector<2xf32> to vector<2x1xf32>
    %451 = vector.broadcast %450 : vector<2x1xf32> to vector<2x8xf32>
    %452 = arith.subf %448, %451 : vector<2x8xf32>
    %453 = math.exp %452 : vector<2x8xf32>
    %cst_159 = arith.constant dense<0.000000e+00> : vector<2xf32>
    %454 = vector.multi_reduction <add>, %453, %cst_159 [1] : vector<2x8xf32> to vector<2xf32>
    %455 = vector.shape_cast %454 : vector<2xf32> to vector<2x1xf32>
    %456 = tpu.reciprocal %455 {approx = true} : vector<2x1xf32> -> vector<2x1xf32>
    %457 = arith.mulf %455, %456 : vector<2x1xf32>
    %cst_160 = arith.constant 2.000000e+00 : f32
    %458 = vector.broadcast %cst_160 : f32 to vector<2x1xf32>
    %459 = arith.subf %458, %457 : vector<2x1xf32>
    %460 = arith.mulf %456, %459 : vector<2x1xf32>
    %461 = vector.broadcast %460 : vector<2x1xf32> to vector<2x8xf32>
    %462 = arith.mulf %453, %461 : vector<2x8xf32>
    %463 = vector.shape_cast %462 : vector<2x8xf32> to vector<2x8x1xf32>
    %464 = vector.broadcast %463 : vector<2x8x1xf32> to vector<2x8x128xf32>
    %465 = arith.mulf %464, %7 : vector<2x8x128xf32>
    %cst_161 = arith.constant dense<0.000000e+00> : vector<2x128xf32>
    %466 = vector.multi_reduction <add>, %465, %cst_161 [1] : vector<2x8x128xf32> to vector<2x128xf32>
    %467 = arith.addf %444, %466 : vector<2x128xf32>
    %468 = tpu.concatenate %467, %437 in 1 : vector<2x128xf32>, vector<2x128xf32> -> vector<2x256xf32>
    %cst_162 = arith.constant dense<0.000000e+00> : vector<2x128xf32>
    %469 = tpu.matmul %468, %262, %cst_162 {dimension_numbers = #tpu.dot_dimension_numbers<[1], [0], [0], [1], [0, 0, 1, 1], [], []>} : vector<2x256xf32>, vector<256x128xf32>, vector<2x128xf32> -> vector<2x128xf32>
    %470 = vector.broadcast %264 : vector<1x128xf32> to vector<2x128xf32>
    %471 = arith.addf %469, %470 : vector<2x128xf32>
    %472 = math.tanh %471 : vector<2x128xf32>
    %473 = arith.index_cast %c5_i32_154 : i32 to index
    %c0_163 = arith.constant 0 : index
    %c0_164 = arith.constant 0 : index
    %474 = vector.load %arg7[%473, %c0_163, %c0_164] : memref<7x2x128xf32, #tpu.memory_space<vmem>>, vector<1x2x128xf32>
    %475 = vector.shape_cast %474 : vector<1x2x128xf32> to vector<2x128xf32>
    %476 = vector.shape_cast %472 : vector<2x128xf32> to vector<1x2x128xf32>
    tpu.vector_store %arg7[%473, %c0_163, %c0_164], %476 {strides = array<i32>} : memref<7x2x128xf32, #tpu.memory_space<vmem>>, vector<1x2x128xf32>,
    %c6_i32_165 = arith.constant 6 : i32
    %477 = arith.index_cast %c6_i32_165 : i32 to index
    %c0_166 = arith.constant 0 : index
    %c0_167 = arith.constant 0 : index
    %478 = vector.load %arg7[%477, %c0_166, %c0_167] : memref<7x2x128xf32, #tpu.memory_space<vmem>>, vector<1x2x128xf32>
    %479 = vector.shape_cast %478 : vector<1x2x128xf32> to vector<2x128xf32>
    %480 = vector.shape_cast %472 : vector<2x128xf32> to vector<2x1x128xf32>
    %481 = vector.broadcast %480 : vector<2x1x128xf32> to vector<2x8x128xf32>
    %482 = arith.mulf %481, %0 : vector<2x8x128xf32>
    %cst_168 = arith.constant dense<0.000000e+00> : vector<2x8xf32>
    %483 = vector.multi_reduction <add>, %482, %cst_168 [2] : vector<2x8x128xf32> to vector<2x8xf32>
    %cst_169 = arith.constant dense<0xFF800000> : vector<2xf32>
    %484 = vector.multi_reduction <maximumf>, %483, %cst_169 [1] : vector<2x8xf32> to vector<2xf32>
    %485 = vector.shape_cast %484 : vector<2xf32> to vector<2x1xf32>
    %486 = vector.broadcast %485 : vector<2x1xf32> to vector<2x8xf32>
    %487 = arith.subf %483, %486 : vector<2x8xf32>
    %488 = math.exp %487 : vector<2x8xf32>
    %cst_170 = arith.constant dense<0.000000e+00> : vector<2xf32>
    %489 = vector.multi_reduction <add>, %488, %cst_170 [1] : vector<2x8xf32> to vector<2xf32>
    %490 = vector.shape_cast %489 : vector<2xf32> to vector<2x1xf32>
    %491 = tpu.reciprocal %490 {approx = true} : vector<2x1xf32> -> vector<2x1xf32>
    %492 = arith.mulf %490, %491 : vector<2x1xf32>
    %cst_171 = arith.constant 2.000000e+00 : f32
    %493 = vector.broadcast %cst_171 : f32 to vector<2x1xf32>
    %494 = arith.subf %493, %492 : vector<2x1xf32>
    %495 = arith.mulf %491, %494 : vector<2x1xf32>
    %496 = vector.broadcast %495 : vector<2x1xf32> to vector<2x8xf32>
    %497 = arith.mulf %488, %496 : vector<2x8xf32>
    %498 = vector.shape_cast %497 : vector<2x8xf32> to vector<2x8x1xf32>
    %499 = vector.broadcast %498 : vector<2x8x1xf32> to vector<2x8x128xf32>
    %500 = arith.mulf %499, %7 : vector<2x8x128xf32>
    %cst_172 = arith.constant dense<0.000000e+00> : vector<2x128xf32>
    %501 = vector.multi_reduction <add>, %500, %cst_172 [1] : vector<2x8x128xf32> to vector<2x128xf32>
    %502 = arith.addf %479, %501 : vector<2x128xf32>
    %503 = tpu.concatenate %502, %472 in 1 : vector<2x128xf32>, vector<2x128xf32> -> vector<2x256xf32>
    %cst_173 = arith.constant dense<0.000000e+00> : vector<2x128xf32>
    %504 = tpu.matmul %503, %262, %cst_173 {dimension_numbers = #tpu.dot_dimension_numbers<[1], [0], [0], [1], [0, 0, 1, 1], [], []>} : vector<2x256xf32>, vector<256x128xf32>, vector<2x128xf32> -> vector<2x128xf32>
    %505 = vector.broadcast %264 : vector<1x128xf32> to vector<2x128xf32>
    %506 = arith.addf %504, %505 : vector<2x128xf32>
    %507 = math.tanh %506 : vector<2x128xf32>
    %508 = arith.index_cast %c6_i32_165 : i32 to index
    %c0_174 = arith.constant 0 : index
    %c0_175 = arith.constant 0 : index
    %509 = vector.load %arg7[%508, %c0_174, %c0_175] : memref<7x2x128xf32, #tpu.memory_space<vmem>>, vector<1x2x128xf32>
    %510 = vector.shape_cast %509 : vector<1x2x128xf32> to vector<2x128xf32>
    %511 = vector.shape_cast %507 : vector<2x128xf32> to vector<1x2x128xf32>
    tpu.vector_store %arg7[%508, %c0_174, %c0_175], %511 {strides = array<i32>} : memref<7x2x128xf32, #tpu.memory_space<vmem>>, vector<1x2x128xf32>,
    %c7_i32_176 = arith.constant 7 : i32
    return
  }
}

</mosaic_0001>

<llo_original>
// kernel: attn_rnn_block_forward.1
$region0: #{attn_rnn_block_forward.1}
  #allocation0 [shape = 'u32[]', space=smem, size = 0x4, offset = 0x4, fixed_abs, tag = 'smem constant byte address 0x4 - core index']
  #allocation1 [shape = 'u32[72,128]{1,0:T(1,128)}', space=vmem, size = 0x9000, scoped, tag = 'internal scratch']
  %s0 = inlined_call_operand.vmem [shape: f32[2,8,128], index: 0, kind: input, shape index: {}]
  %s1 = inlined_call_operand.vmem [shape: f32[7,2,128], index: 1, kind: input, shape index: {}]
  %s2 = inlined_call_operand.vmem [shape: f32[2,2,128], index: 2, kind: input, shape index: {}]
  %s3 = inlined_call_operand.vmem [shape: f32[128,128], index: 3, kind: input, shape index: {}]
  %s4 = inlined_call_operand.vmem [shape: f32[1,128], index: 4, kind: input, shape index: {}]
  %s5 = inlined_call_operand.vmem [shape: f32[2,256,128], index: 5, kind: input, shape index: {}]
  %s6 = inlined_call_operand.vmem [shape: f32[2,1,128], index: 6, kind: input, shape index: {}]
  %s7 = inlined_call_operand.hbm [shape: f32[7,2,128], index: 7, kind: output, shape index: {}]
  %s8 = sld [smem:[#allocation0]]
  $region38: #{attn_rnn_block_forward.1} parent=0
    _
  %s10 = ssub.s32 1, %s8
  %s11 = scalar_select 0, %s10, %s8
  $region1: #{attn_rnn_block_forward.1} parent=0
    #allocation2 [shape = 'u8[7168]{0}', space=vmem, size = 0x1c00, scoped, tag = 'output window, operand 0, single buffered']
    #allocation3 [shape = 's32[1]{0}', space=sflag, size = 0x4, scoped, tag = 'scoped memory for attn_rnn_block_forward.1']
    %12 = vsyncpa [#allocation3], 0
    // Predicated region
    $region2: #{attn_rnn_block_forward.1} parent=1 // pred_check
      _
    $region3: #{attn_rnn_block_forward.1} parent=1 // pred_check_branch
      %14 = sbr.rel (0) target = $region5
    $region4: #{attn_rnn_block_forward.1} parent=1 // pred_region
      _
    $region5: #{attn_rnn_block_forward.1} parent=1 // pred_fallthru
      _
    // Predicated region
    $region6: #{attn_rnn_block_forward.1} parent=1 // pred_check
      _
    $region7: #{attn_rnn_block_forward.1} parent=1 // pred_check_branch
      %16 = sbr.rel (0) target = $region9
    $region8: #{attn_rnn_block_forward.1} parent=1 // pred_region
      _
    $region9: #{attn_rnn_block_forward.1} parent=1 // pred_fallthru
      _
    // Predicated region
    $region10: #{attn_rnn_block_forward.1} parent=1 // pred_check
      _
    $region11: #{attn_rnn_block_forward.1} parent=1 // pred_check_branch
      %18 = sbr.rel (0) target = $region13
    $region12: #{attn_rnn_block_forward.1} parent=1 // pred_region
      _
    $region13: #{attn_rnn_block_forward.1} parent=1 // pred_fallthru
      _
    // Predicated region
    $region14: #{attn_rnn_block_forward.1} parent=1 // pred_check
      _
    $region15: #{attn_rnn_block_forward.1} parent=1 // pred_check_branch
      %20 = sbr.rel (0) target = $region17
    $region16: #{attn_rnn_block_forward.1} parent=1 // pred_region
      _
    $region17: #{attn_rnn_block_forward.1} parent=1 // pred_fallthru
      _
    // Predicated region
    $region18: #{attn_rnn_block_forward.1} parent=1 // pred_check
      _
    $region19: #{attn_rnn_block_forward.1} parent=1 // pred_check_branch
      %22 = sbr.rel (0) target = $region21
    $region20: #{attn_rnn_block_forward.1} parent=1 // pred_region
      _
    $region21: #{attn_rnn_block_forward.1} parent=1 // pred_fallthru
      _
    // Predicated region
    $region22: #{attn_rnn_block_forward.1} parent=1 // pred_check
      _
    $region23: #{attn_rnn_block_forward.1} parent=1 // pred_check_branch
      %24 = sbr.rel (0) target = $region25
    $region24: #{attn_rnn_block_forward.1} parent=1 // pred_region
      _
    $region25: #{attn_rnn_block_forward.1} parent=1 // pred_fallthru
      _
    // Predicated region
    $region26: #{attn_rnn_block_forward.1} parent=1 // pred_check
      _
    $region27: #{attn_rnn_block_forward.1} parent=1 // pred_check_branch
      %26 = sbr.rel (0) target = $region29
    $region28: #{attn_rnn_block_forward.1} parent=1 // pred_region
      _
    $region29: #{attn_rnn_block_forward.1} parent=1 // pred_fallthru
      _
    %v27 = vld [vmem:[%s0] sm:$0xff]
    %v28 = vld [vmem:[%s0 + $0x8] sm:$0xff]
    %v29 = vld [vmem:[%s3] sm:$0xff]
    %v30 = vld [vmem:[%s3 + $0x8] sm:$0xff]
    %v31 = vld [vmem:[%s3 + $0x10] sm:$0xff]
    %v32 = vld [vmem:[%s3 + $0x18] sm:$0xff]
    %v33 = vld [vmem:[%s3 + $0x20] sm:$0xff]
    %v34 = vld [vmem:[%s3 + $0x28] sm:$0xff]
    %v35 = vld [vmem:[%s3 + $0x30] sm:$0xff]
    %v36 = vld [vmem:[%s3 + $0x38] sm:$0xff]
    %v37 = vld [vmem:[%s3 + $0x40] sm:$0xff]
    %v38 = vld [vmem:[%s3 + $0x48] sm:$0xff]
    %v39 = vld [vmem:[%s3 + $0x50] sm:$0xff]
    %v40 = vld [vmem:[%s3 + $0x58] sm:$0xff]
    %v41 = vld [vmem:[%s3 + $0x60] sm:$0xff]
    %v42 = vld [vmem:[%s3 + $0x68] sm:$0xff]
    %v43 = vld [vmem:[%s3 + $0x70] sm:$0xff]
    %v44 = vld [vmem:[%s3 + $0x78] sm:$0xff]
    %v45 = vld [vmem:[%s4] sm:$0x1]
    %v47 = vperm.slane %v45, 0
    %49 = vmatpush.msra.mxu0 %v44
    %50 = vmatpush.msra.mxu0 %v43
    %51 = vmatpush.msra.mxu0 %v42
    %52 = vmatpush.msra.mxu0 %v41
    %53 = vmatpush.msra.mxu0 %v40
    %54 = vmatpush.msra.mxu0 %v39
    %55 = vmatpush.msra.mxu0 %v38
    %56 = vmatpush.msra.mxu0 %v37
    %57 = vmatpush.msra.mxu0 %v36
    %58 = vmatpush.msra.mxu0 %v35
    %59 = vmatpush.msra.mxu0 %v34
    %60 = vmatpush.msra.mxu0 %v33
    %61 = vmatpush.msra.mxu0 %v32
    %62 = vmatpush.msra.mxu0 %v31
    %63 = vmatpush.msra.mxu0 %v30
    %64 = vmatpush.msra.mxu0 %v29
    %65 = vmatmul.f32.gmra.mxu0 %v27
    %v66 = vpop.f32.mrf.mxu0
    %v67 = vadd.f32 %v47, %v66
    %68 = vmatmul.f32.gmra.mxu0 %v28
    %v69 = vpop.f32.mrf.mxu0
    %v70 = vadd.f32 %v47, %v69
    %71 = vdwg.mxu0
    %v72 = vld [vmem:[%s1] sm:$0x3]
    %v73 = vld [vmem:[%s1 + $0x2] sm:$0x3]
    %v74 = vld [vmem:[%s1 + $0x4] sm:$0x3]
    %v75 = vld [vmem:[%s1 + $0x6] sm:$0x3]
    %v76 = vld [vmem:[%s1 + $0x8] sm:$0x3]
    %v77 = vld [vmem:[%s1 + $0xa] sm:$0x3]
    %v78 = vld [vmem:[%s1 + $0xc] sm:$0x3]
    %79 = vst [vmem:[#allocation2] sm:$0x3] %v72
    %80 = vst [vmem:[#allocation2 + $0x2] sm:$0x3] %v73
    %81 = vst [vmem:[#allocation2 + $0x4] sm:$0x3] %v74
    %82 = vst [vmem:[#allocation2 + $0x6] sm:$0x3] %v75
    %83 = vst [vmem:[#allocation2 + $0x8] sm:$0x3] %v76
    %84 = vst [vmem:[#allocation2 + $0xa] sm:$0x3] %v77
    %85 = vst [vmem:[#allocation2 + $0xc] sm:$0x3] %v78
    %v86 = vld [vmem:[%s5] sm:$0xff]
    %v87 = vld [vmem:[%s5 + $0x8] sm:$0xff]
    %v88 = vld [vmem:[%s5 + $0x10] sm:$0xff]
    %v89 = vld [vmem:[%s5 + $0x18] sm:$0xff]
    %v90 = vld [vmem:[%s5 + $0x20] sm:$0xff]
    %v91 = vld [vmem:[%s5 + $0x28] sm:$0xff]
    %v92 = vld [vmem:[%s5 + $0x30] sm:$0xff]
    %v93 = vld [vmem:[%s5 + $0x38] sm:$0xff]
    %v94 = vld [vmem:[%s5 + $0x40] sm:$0xff]
    %v95 = vld [vmem:[%s5 + $0x48] sm:$0xff]
    %v96 = vld [vmem:[%s5 + $0x50] sm:$0xff]
    %v97 = vld [vmem:[%s5 + $0x58] sm:$0xff]
    %v98 = vld [vmem:[%s5 + $0x60] sm:$0xff]
    %v99 = vld [vmem:[%s5 + $0x68] sm:$0xff]
    %v100 = vld [vmem:[%s5 + $0x70] sm:$0xff]
    %v101 = vld [vmem:[%s5 + $0x78] sm:$0xff]
    %v102 = vld [vmem:[%s5 + $0x80] sm:$0xff]
    %v103 = vld [vmem:[%s5 + $0x88] sm:$0xff]
    %v104 = vld [vmem:[%s5 + $0x90] sm:$0xff]
    %v105 = vld [vmem:[%s5 + $0x98] sm:$0xff]
    %v106 = vld [vmem:[%s5 + $0xa0] sm:$0xff]
    %v107 = vld [vmem:[%s5 + $0xa8] sm:$0xff]
    %v108 = vld [vmem:[%s5 + $0xb0] sm:$0xff]
    %v109 = vld [vmem:[%s5 + $0xb8] sm:$0xff]
    %v110 = vld [vmem:[%s5 + $0xc0] sm:$0xff]
    %v111 = vld [vmem:[%s5 + $0xc8] sm:$0xff]
    %v112 = vld [vmem:[%s5 + $0xd0] sm:$0xff]
    %v113 = vld [vmem:[%s5 + $0xd8] sm:$0xff]
    %v114 = vld [vmem:[%s5 + $0xe0] sm:$0xff]
    %v115 = vld [vmem:[%s5 + $0xe8] sm:$0xff]
    %v116 = vld [vmem:[%s5 + $0xf0] sm:$0xff]
    %v117 = vld [vmem:[%s5 + $0xf8] sm:$0xff]
    %v118 = vld [vmem:[%s6] sm:$0x1]
    %v119 = vld [vmem:[%s2] sm:$0x3]
    %v120 = vld [vmem:[#allocation2] sm:$0x3]
    %v122 = vrot.slane %v119, 1
    %v123 = vperm.slane %v119, 0
    %v124 = vperm.slane %v122, 0
    %v127 = vmul.f32 %v123, %v27
    %v128 = vmul.f32 %v124, %v28
    %129 = vadd.xlane.f32.xlu0 %v127
    %v130 = vpop.xlane.xlu0 %129
    %131 = vadd.xlane.f32.xlu0 %v128
    %v132 = vpop.xlane.xlu0 %131
    %v135 = vlaneseq
    %v136 = vand.u32 %v135, 127
    %v137 = vperm.slane %v130, %v136
    %v138 = vperm.slane %v132, %v136
    %vm139 = vcmask 1041409
    %v140 = vsel %vm139, %v138, %v137
    %vm142 = vcmask 58368
    %v143 = vsel %vm142, %v140, -inf
    %144 = vmax.xlane.f32.xlu0 %v143
    %v145 = vpop.xlane.xlu0 %144
    %v147 = vperm.slane %v145, 0
    %v148 = vperm.slane %v145, 1
    %v151 = vsub.f32 %v130, %v147
    %v152 = vsub.f32 %v132, %v148
    %v153 = vmul.f32 %v151, 1.442695
    %v154 = vpow.pop %v153
    %v155 = vmul.f32 %v152, 1.442695
    %v156 = vpow.pop %v155
    %159 = vset.pattern.permute.xlu0 0
    %160 = vperm.xlu0 %159, %v154
    %v161 = vpop.permute.xlu0 %160
    %162 = vset.pattern.permute.xlu0 0
    %163 = vperm.xlu0 %162, %v156
    %v164 = vpop.permute.xlu0 %163
    %v165 = vperm.slane %v161, %v136
    %v166 = vperm.slane %v164, %v136
    %v167 = vsel %vm139, %v166, %v165
    %v169 = vsel %vm142, %v167, 0.0
    %170 = vadd.xlane.f32.xlu0 %v169
    %v171 = vpop.xlane.xlu0 %170
    %v172 = vrcp.pop %v171
    %v173 = vmul.f32 %v171, %v172
    %v174 = vsub.f32 2.0, %v173
    %v175 = vmul.f32 %v172, %v174
    %v177 = vperm.slane %v175, 0
    %v178 = vperm.slane %v175, 1
    %v181 = vmul.f32 %v154, %v177
    %v182 = vmul.f32 %v156, %v178
    %184 = vset.pattern.permute.xlu0 0
    %185 = vperm.xlu0 %184, %v181
    %v186 = vpop.permute.xlu0 %185
    %189 = vset.pattern.permute.xlu0 0
    %190 = vperm.xlu0 %189, %v182
    %v191 = vpop.permute.xlu0 %190
    %v193 = vmul.f32 %v186, %v67
    %v194 = vmul.f32 %v191, %v70
    %v195 = vrot.slane %v193, 4
    %v196 = vadd.f32 %v193, %v195
    %v197 = vrot.slane %v196, 2
    %v198 = vadd.f32 %v196, %v197
    %v199 = vrot.slane %v198, 1
    %v200 = vadd.f32 %v198, %v199
    %v201 = vrot.slane %v194, 4
    %v202 = vadd.f32 %v194, %v201
    %v203 = vrot.slane %v202, 2
    %v204 = vadd.f32 %v202, %v203
    %v205 = vrot.slane %v204, 1
    %v206 = vadd.f32 %v204, %v205
    %v209 = vsel %vm139, %v206, %v200
    %v211 = vadd.f32 %v120, %v209
    %v213 = vperm.slane %v118, 0
    %215 = vmatpush.msra.mxu0 %v101
    %216 = vmatpush.msra.mxu0 %v100
    %217 = vmatpush.msra.mxu0 %v99
    %218 = vmatpush.msra.mxu0 %v98
    %219 = vmatpush.msra.mxu0 %v97
    %220 = vmatpush.msra.mxu0 %v96
    %221 = vmatpush.msra.mxu0 %v95
    %222 = vmatpush.msra.mxu0 %v94
    %223 = vmatpush.msra.mxu0 %v93
    %224 = vmatpush.msra.mxu0 %v92
    %225 = vmatpush.msra.mxu0 %v91
    %226 = vmatpush.msra.mxu0 %v90
    %227 = vmatpush.msra.mxu0 %v89
    %228 = vmatpush.msra.mxu0 %v88
    %229 = vmatpush.msra.mxu0 %v87
    %230 = vmatpush.msra.mxu0 %v86
    %231 = vmatmul.f32.gmra.mxu0 %v211
    %v232 = vpop.f32.mrf.mxu0
    %v233 = vadd.f32 %v213, %v232
    %234 = vdwg.mxu0
    %235 = vmatpush.msra.mxu0 %v117
    %236 = vmatpush.msra.mxu0 %v116
    %237 = vmatpush.msra.mxu0 %v115
    %238 = vmatpush.msra.mxu0 %v114
    %239 = vmatpush.msra.mxu0 %v113
    %240 = vmatpush.msra.mxu0 %v112
    %241 = vmatpush.msra.mxu0 %v111
    %242 = vmatpush.msra.mxu0 %v110
    %243 = vmatpush.msra.mxu0 %v109
    %244 = vmatpush.msra.mxu0 %v108
    %245 = vmatpush.msra.mxu0 %v107
    %246 = vmatpush.msra.mxu0 %v106
    %247 = vmatpush.msra.mxu0 %v105
    %248 = vmatpush.msra.mxu0 %v104
    %249 = vmatpush.msra.mxu0 %v103
    %250 = vmatpush.msra.mxu0 %v102
    %251 = vmatmul.f32.gmra.mxu0 %v119
    %v252 = vpop.f32.mrf.mxu0
    %v253 = vadd.f32 %v233, %v252
    %254 = vdwg.mxu0
    %v255 = vtanh.pop %v253
    %256 = vst [vmem:[#allocation2] sm:$0x3] %v255
    %s257 = scalar_lea.vmem [#allocation2], 2
    %v258 = vld [vmem:[%s257] sm:$0x3]
    %v260 = vrot.slane %v255, 1
    %v261 = vperm.slane %v255, 0
    %v262 = vperm.slane %v260, 0
    %v265 = vmul.f32 %v261, %v27
    %v266 = vmul.f32 %v262, %v28
    %267 = vadd.xlane.f32.xlu0 %v265
    %v268 = vpop.xlane.xlu0 %267
    %269 = vadd.xlane.f32.xlu0 %v266
    %v270 = vpop.xlane.xlu0 %269
    %v273 = vperm.slane %v268, %v136
    %v274 = vperm.slane %v270, %v136
    %v275 = vsel %vm139, %v274, %v273
    %v277 = vsel %vm142, %v275, -inf
    %278 = vmax.xlane.f32.xlu0 %v277
    %v279 = vpop.xlane.xlu0 %278
    %v281 = vperm.slane %v279, 0
    %v282 = vperm.slane %v279, 1
    %v285 = vsub.f32 %v268, %v281
    %v286 = vsub.f32 %v270, %v282
    %v287 = vmul.f32 %v285, 1.442695
    %v288 = vpow.pop %v287
    %v289 = vmul.f32 %v286, 1.442695
    %v290 = vpow.pop %v289
    %293 = vset.pattern.permute.xlu0 0
    %294 = vperm.xlu0 %293, %v288
    %v295 = vpop.permute.xlu0 %294
    %296 = vset.pattern.permute.xlu0 0
    %297 = vperm.xlu0 %296, %v290
    %v298 = vpop.permute.xlu0 %297
    %v299 = vperm.slane %v295, %v136
    %v300 = vperm.slane %v298, %v136
    %v301 = vsel %vm139, %v300, %v299
    %v303 = vsel %vm142, %v301, 0.0
    %304 = vadd.xlane.f32.xlu0 %v303
    %v305 = vpop.xlane.xlu0 %304
    %v306 = vrcp.pop %v305
    %v307 = vmul.f32 %v305, %v306
    %v308 = vsub.f32 2.0, %v307
    %v309 = vmul.f32 %v306, %v308
    %v311 = vperm.slane %v309, 0
    %v312 = vperm.slane %v309, 1
    %v315 = vmul.f32 %v288, %v311
    %v316 = vmul.f32 %v290, %v312
    %318 = vset.pattern.permute.xlu0 0
    %319 = vperm.xlu0 %318, %v315
    %v320 = vpop.permute.xlu0 %319
    %323 = vset.pattern.permute.xlu0 0
    %324 = vperm.xlu0 %323, %v316
    %v325 = vpop.permute.xlu0 %324
    %v327 = vmul.f32 %v320, %v67
    %v328 = vmul.f32 %v325, %v70
    %v329 = vrot.slane %v327, 4
    %v330 = vadd.f32 %v327, %v329
    %v331 = vrot.slane %v330, 2
    %v332 = vadd.f32 %v330, %v331
    %v333 = vrot.slane %v332, 1
    %v334 = vadd.f32 %v332, %v333
    %v335 = vrot.slane %v328, 4
    %v336 = vadd.f32 %v328, %v335
    %v337 = vrot.slane %v336, 2
    %v338 = vadd.f32 %v336, %v337
    %v339 = vrot.slane %v338, 1
    %v340 = vadd.f32 %v338, %v339
    %v343 = vsel %vm139, %v340, %v334
    %v345 = vadd.f32 %v258, %v343
    %346 = vmatpush.msra.mxu0 %v101
    %347 = vmatpush.msra.mxu0 %v100
    %348 = vmatpush.msra.mxu0 %v99
    %349 = vmatpush.msra.mxu0 %v98
    %350 = vmatpush.msra.mxu0 %v97
    %351 = vmatpush.msra.mxu0 %v96
    %352 = vmatpush.msra.mxu0 %v95
    %353 = vmatpush.msra.mxu0 %v94
    %354 = vmatpush.msra.mxu0 %v93
    %355 = vmatpush.msra.mxu0 %v92
    %356 = vmatpush.msra.mxu0 %v91
    %357 = vmatpush.msra.mxu0 %v90
    %358 = vmatpush.msra.mxu0 %v89
    %359 = vmatpush.msra.mxu0 %v88
    %360 = vmatpush.msra.mxu0 %v87
    %361 = vmatpush.msra.mxu0 %v86
    %362 = vmatmul.f32.gmra.mxu0 %v345
    %v363 = vpop.f32.mrf.mxu0
    %v364 = vadd.f32 %v213, %v363
    %365 = vdwg.mxu0
    %366 = vmatpush.msra.mxu0 %v117
    %367 = vmatpush.msra.mxu0 %v116
    %368 = vmatpush.msra.mxu0 %v115
    %369 = vmatpush.msra.mxu0 %v114
    %370 = vmatpush.msra.mxu0 %v113
    %371 = vmatpush.msra.mxu0 %v112
    %372 = vmatpush.msra.mxu0 %v111
    %373 = vmatpush.msra.mxu0 %v110
    %374 = vmatpush.msra.mxu0 %v109
    %375 = vmatpush.msra.mxu0 %v108
    %376 = vmatpush.msra.mxu0 %v107
    %377 = vmatpush.msra.mxu0 %v106
    %378 = vmatpush.msra.mxu0 %v105
    %379 = vmatpush.msra.mxu0 %v104
    %380 = vmatpush.msra.mxu0 %v103
    %381 = vmatpush.msra.mxu0 %v102
    %382 = vmatmul.f32.gmra.mxu0 %v255
    %v383 = vpop.f32.mrf.mxu0
    %v384 = vadd.f32 %v364, %v383
    %385 = vdwg.mxu0
    %v386 = vtanh.pop %v384
    %387 = vst [vmem:[%s257] sm:$0x3] %v386
    %s388 = scalar_lea.vmem [#allocation2], 4
    %v389 = vld [vmem:[%s388] sm:$0x3]
    %v391 = vrot.slane %v386, 1
    %v392 = vperm.slane %v386, 0
    %v393 = vperm.slane %v391, 0
    %v396 = vmul.f32 %v392, %v27
    %v397 = vmul.f32 %v393, %v28
    %398 = vadd.xlane.f32.xlu0 %v396
    %v399 = vpop.xlane.xlu0 %398
    %400 = vadd.xlane.f32.xlu0 %v397
    %v401 = vpop.xlane.xlu0 %400
    %v404 = vperm.slane %v399, %v136
    %v405 = vperm.slane %v401, %v136
    %v406 = vsel %vm139, %v405, %v404
    %v408 = vsel %vm142, %v406, -inf
    %409 = vmax.xlane.f32.xlu0 %v408
    %v410 = vpop.xlane.xlu0 %409
    %v412 = vperm.slane %v410, 0
    %v413 = vperm.slane %v410, 1
    %v416 = vsub.f32 %v399, %v412
    %v417 = vsub.f32 %v401, %v413
    %v418 = vmul.f32 %v416, 1.442695
    %v419 = vpow.pop %v418
    %v420 = vmul.f32 %v417, 1.442695
    %v421 = vpow.pop %v420
    %424 = vset.pattern.permute.xlu0 0
    %425 = vperm.xlu0 %424, %v419
    %v426 = vpop.permute.xlu0 %425
    %427 = vset.pattern.permute.xlu0 0
    %428 = vperm.xlu0 %427, %v421
    %v429 = vpop.permute.xlu0 %428
    %v430 = vperm.slane %v426, %v136
    %v431 = vperm.slane %v429, %v136
    %v432 = vsel %vm139, %v431, %v430
    %v434 = vsel %vm142, %v432, 0.0
    %435 = vadd.xlane.f32.xlu0 %v434
    %v436 = vpop.xlane.xlu0 %435
    %v437 = vrcp.pop %v436
    %v438 = vmul.f32 %v436, %v437
    %v439 = vsub.f32 2.0, %v438
    %v440 = vmul.f32 %v437, %v439
    %v442 = vperm.slane %v440, 0
    %v443 = vperm.slane %v440, 1
    %v446 = vmul.f32 %v419, %v442
    %v447 = vmul.f32 %v421, %v443
    %449 = vset.pattern.permute.xlu0 0
    %450 = vperm.xlu0 %449, %v446
    %v451 = vpop.permute.xlu0 %450
    %454 = vset.pattern.permute.xlu0 0
    %455 = vperm.xlu0 %454, %v447
    %v456 = vpop.permute.xlu0 %455
    %v458 = vmul.f32 %v451, %v67
    %v459 = vmul.f32 %v456, %v70
    %v460 = vrot.slane %v458, 4
    %v461 = vadd.f32 %v458, %v460
    %v462 = vrot.slane %v461, 2
    %v463 = vadd.f32 %v461, %v462
    %v464 = vrot.slane %v463, 1
    %v465 = vadd.f32 %v463, %v464
    %v466 = vrot.slane %v459, 4
    %v467 = vadd.f32 %v459, %v466
    %v468 = vrot.slane %v467, 2
    %v469 = vadd.f32 %v467, %v468
    %v470 = vrot.slane %v469, 1
    %v471 = vadd.f32 %v469, %v470
    %v474 = vsel %vm139, %v471, %v465
    %v476 = vadd.f32 %v389, %v474
    %477 = vmatpush.msra.mxu0 %v101
    %478 = vmatpush.msra.mxu0 %v100
    %479 = vmatpush.msra.mxu0 %v99
    %480 = vmatpush.msra.mxu0 %v98
    %481 = vmatpush.msra.mxu0 %v97
    %482 = vmatpush.msra.mxu0 %v96
    %483 = vmatpush.msra.mxu0 %v95
    %484 = vmatpush.msra.mxu0 %v94
    %485 = vmatpush.msra.mxu0 %v93
    %486 = vmatpush.msra.mxu0 %v92
    %487 = vmatpush.msra.mxu0 %v91
    %488 = vmatpush.msra.mxu0 %v90
    %489 = vmatpush.msra.mxu0 %v89
    %490 = vmatpush.msra.mxu0 %v88
    %491 = vmatpush.msra.mxu0 %v87
    %492 = vmatpush.msra.mxu0 %v86
    %493 = vmatmul.f32.gmra.mxu0 %v476
    %v494 = vpop.f32.mrf.mxu0
    %v495 = vadd.f32 %v213, %v494
    %496 = vdwg.mxu0
    %497 = vmatpush.msra.mxu0 %v117
    %498 = vmatpush.msra.mxu0 %v116
    %499 = vmatpush.msra.mxu0 %v115
    %500 = vmatpush.msra.mxu0 %v114
    %501 = vmatpush.msra.mxu0 %v113
    %502 = vmatpush.msra.mxu0 %v112
    %503 = vmatpush.msra.mxu0 %v111
    %504 = vmatpush.msra.mxu0 %v110
    %505 = vmatpush.msra.mxu0 %v109
    %506 = vmatpush.msra.mxu0 %v108
    %507 = vmatpush.msra.mxu0 %v107
    %508 = vmatpush.msra.mxu0 %v106
    %509 = vmatpush.msra.mxu0 %v105
    %510 = vmatpush.msra.mxu0 %v104
    %511 = vmatpush.msra.mxu0 %v103
    %512 = vmatpush.msra.mxu0 %v102
    %513 = vmatmul.f32.gmra.mxu0 %v386
    %v514 = vpop.f32.mrf.mxu0
    %v515 = vadd.f32 %v495, %v514
    %516 = vdwg.mxu0
    %v517 = vtanh.pop %v515
    %518 = vst [vmem:[%s388] sm:$0x3] %v517
    %s519 = scalar_lea.vmem [#allocation2], 6
    %v520 = vld [vmem:[%s519] sm:$0x3]
    %v522 = vrot.slane %v517, 1
    %v523 = vperm.slane %v517, 0
    %v524 = vperm.slane %v522, 0
    %v527 = vmul.f32 %v523, %v27
    %v528 = vmul.f32 %v524, %v28
    %529 = vadd.xlane.f32.xlu0 %v527
    %v530 = vpop.xlane.xlu0 %529
    %531 = vadd.xlane.f32.xlu0 %v528
    %v532 = vpop.xlane.xlu0 %531
    %v535 = vperm.slane %v530, %v136
    %v536 = vperm.slane %v532, %v136
    %v537 = vsel %vm139, %v536, %v535
    %v539 = vsel %vm142, %v537, -inf
    %540 = vmax.xlane.f32.xlu0 %v539
    %v541 = vpop.xlane.xlu0 %540
    %v543 = vperm.slane %v541, 0
    %v544 = vperm.slane %v541, 1
    %v547 = vsub.f32 %v530, %v543
    %v548 = vsub.f32 %v532, %v544
    %v549 = vmul.f32 %v547, 1.442695
    %v550 = vpow.pop %v549
    %v551 = vmul.f32 %v548, 1.442695
    %v552 = vpow.pop %v551
    %555 = vset.pattern.permute.xlu0 0
    %556 = vperm.xlu0 %555, %v550
    %v557 = vpop.permute.xlu0 %556
    %558 = vset.pattern.permute.xlu0 0
    %559 = vperm.xlu0 %558, %v552
    %v560 = vpop.permute.xlu0 %559
    %v561 = vperm.slane %v557, %v136
    %v562 = vperm.slane %v560, %v136
    %v563 = vsel %vm139, %v562, %v561
    %v565 = vsel %vm142, %v563, 0.0
    %566 = vadd.xlane.f32.xlu0 %v565
    %v567 = vpop.xlane.xlu0 %566
    %v568 = vrcp.pop %v567
    %v569 = vmul.f32 %v567, %v568
    %v570 = vsub.f32 2.0, %v569
    %v571 = vmul.f32 %v568, %v570
    %v573 = vperm.slane %v571, 0
    %v574 = vperm.slane %v571, 1
    %v577 = vmul.f32 %v550, %v573
    %v578 = vmul.f32 %v552, %v574
    %580 = vset.pattern.permute.xlu0 0
    %581 = vperm.xlu0 %580, %v577
    %v582 = vpop.permute.xlu0 %581
    %585 = vset.pattern.permute.xlu0 0
    %586 = vperm.xlu0 %585, %v578
    %v587 = vpop.permute.xlu0 %586
    %v589 = vmul.f32 %v582, %v67
    %v590 = vmul.f32 %v587, %v70
    %v591 = vrot.slane %v589, 4
    %v592 = vadd.f32 %v589, %v591
    %v593 = vrot.slane %v592, 2
    %v594 = vadd.f32 %v592, %v593
    %v595 = vrot.slane %v594, 1
    %v596 = vadd.f32 %v594, %v595
    %v597 = vrot.slane %v590, 4
    %v598 = vadd.f32 %v590, %v597
    %v599 = vrot.slane %v598, 2
    %v600 = vadd.f32 %v598, %v599
    %v601 = vrot.slane %v600, 1
    %v602 = vadd.f32 %v600, %v601
    %v605 = vsel %vm139, %v602, %v596
    %v607 = vadd.f32 %v520, %v605
    %608 = vmatpush.msra.mxu0 %v101
    %609 = vmatpush.msra.mxu0 %v100
    %610 = vmatpush.msra.mxu0 %v99
    %611 = vmatpush.msra.mxu0 %v98
    %612 = vmatpush.msra.mxu0 %v97
    %613 = vmatpush.msra.mxu0 %v96
    %614 = vmatpush.msra.mxu0 %v95
    %615 = vmatpush.msra.mxu0 %v94
    %616 = vmatpush.msra.mxu0 %v93
    %617 = vmatpush.msra.mxu0 %v92
    %618 = vmatpush.msra.mxu0 %v91
    %619 = vmatpush.msra.mxu0 %v90
    %620 = vmatpush.msra.mxu0 %v89
    %621 = vmatpush.msra.mxu0 %v88
    %622 = vmatpush.msra.mxu0 %v87
    %623 = vmatpush.msra.mxu0 %v86
    %624 = vmatmul.f32.gmra.mxu0 %v607
    %v625 = vpop.f32.mrf.mxu0
    %v626 = vadd.f32 %v213, %v625
    %627 = vdwg.mxu0
    %628 = vmatpush.msra.mxu0 %v117
    %629 = vmatpush.msra.mxu0 %v116
    %630 = vmatpush.msra.mxu0 %v115
    %631 = vmatpush.msra.mxu0 %v114
    %632 = vmatpush.msra.mxu0 %v113
    %633 = vmatpush.msra.mxu0 %v112
    %634 = vmatpush.msra.mxu0 %v111
    %635 = vmatpush.msra.mxu0 %v110
    %636 = vmatpush.msra.mxu0 %v109
    %637 = vmatpush.msra.mxu0 %v108
    %638 = vmatpush.msra.mxu0 %v107
    %639 = vmatpush.msra.mxu0 %v106
    %640 = vmatpush.msra.mxu0 %v105
    %641 = vmatpush.msra.mxu0 %v104
    %642 = vmatpush.msra.mxu0 %v103
    %643 = vmatpush.msra.mxu0 %v102
    %644 = vmatmul.f32.gmra.mxu0 %v517
    %v645 = vpop.f32.mrf.mxu0
    %v646 = vadd.f32 %v626, %v645
    %647 = vdwg.mxu0
    %v648 = vtanh.pop %v646
    %649 = vst [vmem:[%s519] sm:$0x3] %v648
    %s650 = scalar_lea.vmem [#allocation2], 8
    %v651 = vld [vmem:[%s650] sm:$0x3]
    %v653 = vrot.slane %v648, 1
    %v654 = vperm.slane %v648, 0
    %v655 = vperm.slane %v653, 0
    %v658 = vmul.f32 %v654, %v27
    %v659 = vmul.f32 %v655, %v28
    %660 = vadd.xlane.f32.xlu0 %v658
    %v661 = vpop.xlane.xlu0 %660
    %662 = vadd.xlane.f32.xlu0 %v659
    %v663 = vpop.xlane.xlu0 %662
    %v666 = vperm.slane %v661, %v136
    %v667 = vperm.slane %v663, %v136
    %v668 = vsel %vm139, %v667, %v666
    %v670 = vsel %vm142, %v668, -inf
    %671 = vmax.xlane.f32.xlu0 %v670
    %v672 = vpop.xlane.xlu0 %671
    %v674 = vperm.slane %v672, 0
    %v675 = vperm.slane %v672, 1
    %v678 = vsub.f32 %v661, %v674
    %v679 = vsub.f32 %v663, %v675
    %v680 = vmul.f32 %v678, 1.442695
    %v681 = vpow.pop %v680
    %v682 = vmul.f32 %v679, 1.442695
    %v683 = vpow.pop %v682
    %686 = vset.pattern.permute.xlu0 0
    %687 = vperm.xlu0 %686, %v681
    %v688 = vpop.permute.xlu0 %687
    %689 = vset.pattern.permute.xlu0 0
    %690 = vperm.xlu0 %689, %v683
    %v691 = vpop.permute.xlu0 %690
    %v692 = vperm.slane %v688, %v136
    %v693 = vperm.slane %v691, %v136
    %v694 = vsel %vm139, %v693, %v692
    %v696 = vsel %vm142, %v694, 0.0
    %697 = vadd.xlane.f32.xlu0 %v696
    %v698 = vpop.xlane.xlu0 %697
    %v699 = vrcp.pop %v698
    %v700 = vmul.f32 %v698, %v699
    %v701 = vsub.f32 2.0, %v700
    %v702 = vmul.f32 %v699, %v701
    %v704 = vperm.slane %v702, 0
    %v705 = vperm.slane %v702, 1
    %v708 = vmul.f32 %v681, %v704
    %v709 = vmul.f32 %v683, %v705
    %711 = vset.pattern.permute.xlu0 0
    %712 = vperm.xlu0 %711, %v708
    %v713 = vpop.permute.xlu0 %712
    %716 = vset.pattern.permute.xlu0 0
    %717 = vperm.xlu0 %716, %v709
    %v718 = vpop.permute.xlu0 %717
    %v720 = vmul.f32 %v713, %v67
    %v721 = vmul.f32 %v718, %v70
    %v722 = vrot.slane %v720, 4
    %v723 = vadd.f32 %v720, %v722
    %v724 = vrot.slane %v723, 2
    %v725 = vadd.f32 %v723, %v724
    %v726 = vrot.slane %v725, 1
    %v727 = vadd.f32 %v725, %v726
    %v728 = vrot.slane %v721, 4
    %v729 = vadd.f32 %v721, %v728
    %v730 = vrot.slane %v729, 2
    %v731 = vadd.f32 %v729, %v730
    %v732 = vrot.slane %v731, 1
    %v733 = vadd.f32 %v731, %v732
    %v736 = vsel %vm139, %v733, %v727
    %v738 = vadd.f32 %v651, %v736
    %739 = vmatpush.msra.mxu0 %v101
    %740 = vmatpush.msra.mxu0 %v100
    %741 = vmatpush.msra.mxu0 %v99
    %742 = vmatpush.msra.mxu0 %v98
    %743 = vmatpush.msra.mxu0 %v97
    %744 = vmatpush.msra.mxu0 %v96
    %745 = vmatpush.msra.mxu0 %v95
    %746 = vmatpush.msra.mxu0 %v94
    %747 = vmatpush.msra.mxu0 %v93
    %748 = vmatpush.msra.mxu0 %v92
    %749 = vmatpush.msra.mxu0 %v91
    %750 = vmatpush.msra.mxu0 %v90
    %751 = vmatpush.msra.mxu0 %v89
    %752 = vmatpush.msra.mxu0 %v88
    %753 = vmatpush.msra.mxu0 %v87
    %754 = vmatpush.msra.mxu0 %v86
    %755 = vmatmul.f32.gmra.mxu0 %v738
    %v756 = vpop.f32.mrf.mxu0
    %v757 = vadd.f32 %v213, %v756
    %758 = vdwg.mxu0
    %759 = vmatpush.msra.mxu0 %v117
    %760 = vmatpush.msra.mxu0 %v116
    %761 = vmatpush.msra.mxu0 %v115
    %762 = vmatpush.msra.mxu0 %v114
    %763 = vmatpush.msra.mxu0 %v113
    %764 = vmatpush.msra.mxu0 %v112
    %765 = vmatpush.msra.mxu0 %v111
    %766 = vmatpush.msra.mxu0 %v110
    %767 = vmatpush.msra.mxu0 %v109
    %768 = vmatpush.msra.mxu0 %v108
    %769 = vmatpush.msra.mxu0 %v107
    %770 = vmatpush.msra.mxu0 %v106
    %771 = vmatpush.msra.mxu0 %v105
    %772 = vmatpush.msra.mxu0 %v104
    %773 = vmatpush.msra.mxu0 %v103
    %774 = vmatpush.msra.mxu0 %v102
    %775 = vmatmul.f32.gmra.mxu0 %v648
    %v776 = vpop.f32.mrf.mxu0
    %v777 = vadd.f32 %v757, %v776
    %778 = vdwg.mxu0
    %v779 = vtanh.pop %v777
    %780 = vst [vmem:[%s650] sm:$0x3] %v779
    %s781 = scalar_lea.vmem [#allocation2], 10
    %v782 = vld [vmem:[%s781] sm:$0x3]
    %v784 = vrot.slane %v779, 1
    %v785 = vperm.slane %v779, 0
    %v786 = vperm.slane %v784, 0
    %v789 = vmul.f32 %v785, %v27
    %v790 = vmul.f32 %v786, %v28
    %791 = vadd.xlane.f32.xlu0 %v789
    %v792 = vpop.xlane.xlu0 %791
    %793 = vadd.xlane.f32.xlu0 %v790
    %v794 = vpop.xlane.xlu0 %793
    %v797 = vperm.slane %v792, %v136
    %v798 = vperm.slane %v794, %v136
    %v799 = vsel %vm139, %v798, %v797
    %v801 = vsel %vm142, %v799, -inf
    %802 = vmax.xlane.f32.xlu0 %v801
    %v803 = vpop.xlane.xlu0 %802
    %v805 = vperm.slane %v803, 0
    %v806 = vperm.slane %v803, 1
    %v809 = vsub.f32 %v792, %v805
    %v810 = vsub.f32 %v794, %v806
    %v811 = vmul.f32 %v809, 1.442695
    %v812 = vpow.pop %v811
    %v813 = vmul.f32 %v810, 1.442695
    %v814 = vpow.pop %v813
    %817 = vset.pattern.permute.xlu0 0
    %818 = vperm.xlu0 %817, %v812
    %v819 = vpop.permute.xlu0 %818
    %820 = vset.pattern.permute.xlu0 0
    %821 = vperm.xlu0 %820, %v814
    %v822 = vpop.permute.xlu0 %821
    %v823 = vperm.slane %v819, %v136
    %v824 = vperm.slane %v822, %v136
    %v825 = vsel %vm139, %v824, %v823
    %v827 = vsel %vm142, %v825, 0.0
    %828 = vadd.xlane.f32.xlu0 %v827
    %v829 = vpop.xlane.xlu0 %828
    %v830 = vrcp.pop %v829
    %v831 = vmul.f32 %v829, %v830
    %v832 = vsub.f32 2.0, %v831
    %v833 = vmul.f32 %v830, %v832
    %v835 = vperm.slane %v833, 0
    %v836 = vperm.slane %v833, 1
    %v839 = vmul.f32 %v812, %v835
    %v840 = vmul.f32 %v814, %v836
    %842 = vset.pattern.permute.xlu0 0
    %843 = vperm.xlu0 %842, %v839
    %v844 = vpop.permute.xlu0 %843
    %847 = vset.pattern.permute.xlu0 0
    %848 = vperm.xlu0 %847, %v840
    %v849 = vpop.permute.xlu0 %848
    %v851 = vmul.f32 %v844, %v67
    %v852 = vmul.f32 %v849, %v70
    %v853 = vrot.slane %v851, 4
    %v854 = vadd.f32 %v851, %v853
    %v855 = vrot.slane %v854, 2
    %v856 = vadd.f32 %v854, %v855
    %v857 = vrot.slane %v856, 1
    %v858 = vadd.f32 %v856, %v857
    %v859 = vrot.slane %v852, 4
    %v860 = vadd.f32 %v852, %v859
    %v861 = vrot.slane %v860, 2
    %v862 = vadd.f32 %v860, %v861
    %v863 = vrot.slane %v862, 1
    %v864 = vadd.f32 %v862, %v863
    %v867 = vsel %vm139, %v864, %v858
    %v869 = vadd.f32 %v782, %v867
    %870 = vmatpush.msra.mxu0 %v101
    %871 = vmatpush.msra.mxu0 %v100
    %872 = vmatpush.msra.mxu0 %v99
    %873 = vmatpush.msra.mxu0 %v98
    %874 = vmatpush.msra.mxu0 %v97
    %875 = vmatpush.msra.mxu0 %v96
    %876 = vmatpush.msra.mxu0 %v95
    %877 = vmatpush.msra.mxu0 %v94
    %878 = vmatpush.msra.mxu0 %v93
    %879 = vmatpush.msra.mxu0 %v92
    %880 = vmatpush.msra.mxu0 %v91
    %881 = vmatpush.msra.mxu0 %v90
    %882 = vmatpush.msra.mxu0 %v89
    %883 = vmatpush.msra.mxu0 %v88
    %884 = vmatpush.msra.mxu0 %v87
    %885 = vmatpush.msra.mxu0 %v86
    %886 = vmatmul.f32.gmra.mxu0 %v869
    %v887 = vpop.f32.mrf.mxu0
    %v888 = vadd.f32 %v213, %v887
    %889 = vdwg.mxu0
    %890 = vmatpush.msra.mxu0 %v117
    %891 = vmatpush.msra.mxu0 %v116
    %892 = vmatpush.msra.mxu0 %v115
    %893 = vmatpush.msra.mxu0 %v114
    %894 = vmatpush.msra.mxu0 %v113
    %895 = vmatpush.msra.mxu0 %v112
    %896 = vmatpush.msra.mxu0 %v111
    %897 = vmatpush.msra.mxu0 %v110
    %898 = vmatpush.msra.mxu0 %v109
    %899 = vmatpush.msra.mxu0 %v108
    %900 = vmatpush.msra.mxu0 %v107
    %901 = vmatpush.msra.mxu0 %v106
    %902 = vmatpush.msra.mxu0 %v105
    %903 = vmatpush.msra.mxu0 %v104
    %904 = vmatpush.msra.mxu0 %v103
    %905 = vmatpush.msra.mxu0 %v102
    %906 = vmatmul.f32.gmra.mxu0 %v779
    %v907 = vpop.f32.mrf.mxu0
    %v908 = vadd.f32 %v888, %v907
    %909 = vdwg.mxu0
    %v910 = vtanh.pop %v908
    %911 = vst [vmem:[%s781] sm:$0x3] %v910
    %s912 = scalar_lea.vmem [#allocation2], 12
    %v913 = vld [vmem:[%s912] sm:$0x3]
    %v915 = vrot.slane %v910, 1
    %v916 = vperm.slane %v910, 0
    %v917 = vperm.slane %v915, 0
    %v920 = vmul.f32 %v916, %v27
    %v921 = vmul.f32 %v917, %v28
    %922 = vadd.xlane.f32.xlu0 %v920
    %v923 = vpop.xlane.xlu0 %922
    %924 = vadd.xlane.f32.xlu0 %v921
    %v925 = vpop.xlane.xlu0 %924
    %v928 = vperm.slane %v923, %v136
    %v929 = vperm.slane %v925, %v136
    %v930 = vsel %vm139, %v929, %v928
    %v932 = vsel %vm142, %v930, -inf
    %933 = vmax.xlane.f32.xlu0 %v932
    %v934 = vpop.xlane.xlu0 %933
    %v936 = vperm.slane %v934, 0
    %v937 = vperm.slane %v934, 1
    %v940 = vsub.f32 %v923, %v936
    %v941 = vsub.f32 %v925, %v937
    %v942 = vmul.f32 %v940, 1.442695
    %v943 = vpow.pop %v942
    %v944 = vmul.f32 %v941, 1.442695
    %v945 = vpow.pop %v944
    %948 = vset.pattern.permute.xlu0 0
    %949 = vperm.xlu0 %948, %v943
    %v950 = vpop.permute.xlu0 %949
    %951 = vset.pattern.permute.xlu0 0
    %952 = vperm.xlu0 %951, %v945
    %v953 = vpop.permute.xlu0 %952
    %v954 = vperm.slane %v950, %v136
    %v955 = vperm.slane %v953, %v136
    %v956 = vsel %vm139, %v955, %v954
    %v958 = vsel %vm142, %v956, 0.0
    %959 = vadd.xlane.f32.xlu0 %v958
    %v960 = vpop.xlane.xlu0 %959
    %v961 = vrcp.pop %v960
    %v962 = vmul.f32 %v960, %v961
    %v963 = vsub.f32 2.0, %v962
    %v964 = vmul.f32 %v961, %v963
    %v966 = vperm.slane %v964, 0
    %v967 = vperm.slane %v964, 1
    %v970 = vmul.f32 %v943, %v966
    %v971 = vmul.f32 %v945, %v967
    %973 = vset.pattern.permute.xlu0 0
    %974 = vperm.xlu0 %973, %v970
    %v975 = vpop.permute.xlu0 %974
    %978 = vset.pattern.permute.xlu0 0
    %979 = vperm.xlu0 %978, %v971
    %v980 = vpop.permute.xlu0 %979
    %v982 = vmul.f32 %v975, %v67
    %v983 = vmul.f32 %v980, %v70
    %v984 = vrot.slane %v982, 4
    %v985 = vadd.f32 %v982, %v984
    %v986 = vrot.slane %v985, 2
    %v987 = vadd.f32 %v985, %v986
    %v988 = vrot.slane %v987, 1
    %v989 = vadd.f32 %v987, %v988
    %v990 = vrot.slane %v983, 4
    %v991 = vadd.f32 %v983, %v990
    %v992 = vrot.slane %v991, 2
    %v993 = vadd.f32 %v991, %v992
    %v994 = vrot.slane %v993, 1
    %v995 = vadd.f32 %v993, %v994
    %v998 = vsel %vm139, %v995, %v989
    %v1000 = vadd.f32 %v913, %v998
    %1001 = vmatpush.msra.mxu0 %v101
    %1002 = vmatpush.msra.mxu0 %v100
    %1003 = vmatpush.msra.mxu0 %v99
    %1004 = vmatpush.msra.mxu0 %v98
    %1005 = vmatpush.msra.mxu0 %v97
    %1006 = vmatpush.msra.mxu0 %v96
    %1007 = vmatpush.msra.mxu0 %v95
    %1008 = vmatpush.msra.mxu0 %v94
    %1009 = vmatpush.msra.mxu0 %v93
    %1010 = vmatpush.msra.mxu0 %v92
    %1011 = vmatpush.msra.mxu0 %v91
    %1012 = vmatpush.msra.mxu0 %v90
    %1013 = vmatpush.msra.mxu0 %v89
    %1014 = vmatpush.msra.mxu0 %v88
    %1015 = vmatpush.msra.mxu0 %v87
    %1016 = vmatpush.msra.mxu0 %v86
    %1017 = vmatmul.f32.gmra.mxu0 %v1000
    %v1018 = vpop.f32.mrf.mxu0
    %v1019 = vadd.f32 %v213, %v1018
    %1020 = vdwg.mxu0
    %1021 = vmatpush.msra.mxu0 %v117
    %1022 = vmatpush.msra.mxu0 %v116
    %1023 = vmatpush.msra.mxu0 %v115
    %1024 = vmatpush.msra.mxu0 %v114
    %1025 = vmatpush.msra.mxu0 %v113
    %1026 = vmatpush.msra.mxu0 %v112
    %1027 = vmatpush.msra.mxu0 %v111
    %1028 = vmatpush.msra.mxu0 %v110
    %1029 = vmatpush.msra.mxu0 %v109
    %1030 = vmatpush.msra.mxu0 %v108
    %1031 = vmatpush.msra.mxu0 %v107
    %1032 = vmatpush.msra.mxu0 %v106
    %1033 = vmatpush.msra.mxu0 %v105
    %1034 = vmatpush.msra.mxu0 %v104
    %1035 = vmatpush.msra.mxu0 %v103
    %1036 = vmatpush.msra.mxu0 %v102
    %1037 = vmatmul.f32.gmra.mxu0 %v910
    %v1038 = vpop.f32.mrf.mxu0
    %v1039 = vadd.f32 %v1019, %v1038
    %1040 = vdwg.mxu0
    %v1041 = vtanh.pop %v1039
    %1042 = vst [vmem:[%s912] sm:$0x3] %v1041
    %s1043 = scalar_lea.vmem %s5, 256
    %v1044 = vld [vmem:[%s1043] sm:$0xff]
    %v1045 = vld [vmem:[%s1043 + $0x8] sm:$0xff]
    %v1046 = vld [vmem:[%s1043 + $0x10] sm:$0xff]
    %v1047 = vld [vmem:[%s1043 + $0x18] sm:$0xff]
    %v1048 = vld [vmem:[%s1043 + $0x20] sm:$0xff]
    %v1049 = vld [vmem:[%s1043 + $0x28] sm:$0xff]
    %v1050 = vld [vmem:[%s1043 + $0x30] sm:$0xff]
    %v1051 = vld [vmem:[%s1043 + $0x38] sm:$0xff]
    %v1052 = vld [vmem:[%s1043 + $0x40] sm:$0xff]
    %v1053 = vld [vmem:[%s1043 + $0x48] sm:$0xff]
    %v1054 = vld [vmem:[%s1043 + $0x50] sm:$0xff]
    %v1055 = vld [vmem:[%s1043 + $0x58] sm:$0xff]
    %v1056 = vld [vmem:[%s1043 + $0x60] sm:$0xff]
    %v1057 = vld [vmem:[%s1043 + $0x68] sm:$0xff]
    %v1058 = vld [vmem:[%s1043 + $0x70] sm:$0xff]
    %v1059 = vld [vmem:[%s1043 + $0x78] sm:$0xff]
    %v1060 = vld [vmem:[%s1043 + $0x80] sm:$0xff]
    %v1061 = vld [vmem:[%s1043 + $0x88] sm:$0xff]
    %v1062 = vld [vmem:[%s1043 + $0x90] sm:$0xff]
    %v1063 = vld [vmem:[%s1043 + $0x98] sm:$0xff]
    %v1064 = vld [vmem:[%s1043 + $0xa0] sm:$0xff]
    %v1065 = vld [vmem:[%s1043 + $0xa8] sm:$0xff]
    %v1066 = vld [vmem:[%s1043 + $0xb0] sm:$0xff]
    %v1067 = vld [vmem:[%s1043 + $0xb8] sm:$0xff]
    %v1068 = vld [vmem:[%s1043 + $0xc0] sm:$0xff]
    %v1069 = vld [vmem:[%s1043 + $0xc8] sm:$0xff]
    %v1070 = vld [vmem:[%s1043 + $0xd0] sm:$0xff]
    %v1071 = vld [vmem:[%s1043 + $0xd8] sm:$0xff]
    %v1072 = vld [vmem:[%s1043 + $0xe0] sm:$0xff]
    %v1073 = vld [vmem:[%s1043 + $0xe8] sm:$0xff]
    %v1074 = vld [vmem:[%s1043 + $0xf0] sm:$0xff]
    %v1075 = vld [vmem:[%s1043 + $0xf8] sm:$0xff]
    %s1076 = scalar_lea.vmem %s6, 1
    %v1077 = vld [vmem:[%s1076] sm:$0x1]
    %s1078 = scalar_lea.vmem %s2, 2
    %v1079 = vld [vmem:[%s1078] sm:$0x3]
    %v1080 = vld [vmem:[#allocation2] sm:$0x3]
    %v1082 = vrot.slane %v1079, 1
    %v1083 = vperm.slane %v1079, 0
    %v1084 = vperm.slane %v1082, 0
    %v1087 = vmul.f32 %v1083, %v27
    %v1088 = vmul.f32 %v1084, %v28
    %1089 = vadd.xlane.f32.xlu0 %v1087
    %v1090 = vpop.xlane.xlu0 %1089
    %1091 = vadd.xlane.f32.xlu0 %v1088
    %v1092 = vpop.xlane.xlu0 %1091
    %v1095 = vperm.slane %v1090, %v136
    %v1096 = vperm.slane %v1092, %v136
    %v1097 = vsel %vm139, %v1096, %v1095
    %v1099 = vsel %vm142, %v1097, -inf
    %1100 = vmax.xlane.f32.xlu0 %v1099
    %v1101 = vpop.xlane.xlu0 %1100
    %v1103 = vperm.slane %v1101, 0
    %v1104 = vperm.slane %v1101, 1
    %v1107 = vsub.f32 %v1090, %v1103
    %v1108 = vsub.f32 %v1092, %v1104
    %v1109 = vmul.f32 %v1107, 1.442695
    %v1110 = vpow.pop %v1109
    %v1111 = vmul.f32 %v1108, 1.442695
    %v1112 = vpow.pop %v1111
    %1115 = vset.pattern.permute.xlu0 0
    %1116 = vperm.xlu0 %1115, %v1110
    %v1117 = vpop.permute.xlu0 %1116
    %1118 = vset.pattern.permute.xlu0 0
    %1119 = vperm.xlu0 %1118, %v1112
    %v1120 = vpop.permute.xlu0 %1119
    %v1121 = vperm.slane %v1117, %v136
    %v1122 = vperm.slane %v1120, %v136
    %v1123 = vsel %vm139, %v1122, %v1121
    %v1125 = vsel %vm142, %v1123, 0.0
    %1126 = vadd.xlane.f32.xlu0 %v1125
    %v1127 = vpop.xlane.xlu0 %1126
    %v1128 = vrcp.pop %v1127
    %v1129 = vmul.f32 %v1127, %v1128
    %v1130 = vsub.f32 2.0, %v1129
    %v1131 = vmul.f32 %v1128, %v1130
    %v1133 = vperm.slane %v1131, 0
    %v1134 = vperm.slane %v1131, 1
    %v1137 = vmul.f32 %v1110, %v1133
    %v1138 = vmul.f32 %v1112, %v1134
    %1140 = vset.pattern.permute.xlu0 0
    %1141 = vperm.xlu0 %1140, %v1137
    %v1142 = vpop.permute.xlu0 %1141
    %1145 = vset.pattern.permute.xlu0 0
    %1146 = vperm.xlu0 %1145, %v1138
    %v1147 = vpop.permute.xlu0 %1146
    %v1149 = vmul.f32 %v1142, %v67
    %v1150 = vmul.f32 %v1147, %v70
    %v1151 = vrot.slane %v1149, 4
    %v1152 = vadd.f32 %v1149, %v1151
    %v1153 = vrot.slane %v1152, 2
    %v1154 = vadd.f32 %v1152, %v1153
    %v1155 = vrot.slane %v1154, 1
    %v1156 = vadd.f32 %v1154, %v1155
    %v1157 = vrot.slane %v1150, 4
    %v1158 = vadd.f32 %v1150, %v1157
    %v1159 = vrot.slane %v1158, 2
    %v1160 = vadd.f32 %v1158, %v1159
    %v1161 = vrot.slane %v1160, 1
    %v1162 = vadd.f32 %v1160, %v1161
    %v1165 = vsel %vm139, %v1162, %v1156
    %v1167 = vadd.f32 %v1080, %v1165
    %v1169 = vperm.slane %v1077, 0
    %1171 = vmatpush.msra.mxu0 %v1059
    %1172 = vmatpush.msra.mxu0 %v1058
    %1173 = vmatpush.msra.mxu0 %v1057
    %1174 = vmatpush.msra.mxu0 %v1056
    %1175 = vmatpush.msra.mxu0 %v1055
    %1176 = vmatpush.msra.mxu0 %v1054
    %1177 = vmatpush.msra.mxu0 %v1053
    %1178 = vmatpush.msra.mxu0 %v1052
    %1179 = vmatpush.msra.mxu0 %v1051
    %1180 = vmatpush.msra.mxu0 %v1050
    %1181 = vmatpush.msra.mxu0 %v1049
    %1182 = vmatpush.msra.mxu0 %v1048
    %1183 = vmatpush.msra.mxu0 %v1047
    %1184 = vmatpush.msra.mxu0 %v1046
    %1185 = vmatpush.msra.mxu0 %v1045
    %1186 = vmatpush.msra.mxu0 %v1044
    %1187 = vmatmul.f32.gmra.mxu0 %v1167
    %v1188 = vpop.f32.mrf.mxu0
    %v1189 = vadd.f32 %v1169, %v1188
    %1190 = vdwg.mxu0
    %1191 = vmatpush.msra.mxu0 %v1075
    %1192 = vmatpush.msra.mxu0 %v1074
    %1193 = vmatpush.msra.mxu0 %v1073
    %1194 = vmatpush.msra.mxu0 %v1072
    %1195 = vmatpush.msra.mxu0 %v1071
    %1196 = vmatpush.msra.mxu0 %v1070
    %1197 = vmatpush.msra.mxu0 %v1069
    %1198 = vmatpush.msra.mxu0 %v1068
    %1199 = vmatpush.msra.mxu0 %v1067
    %1200 = vmatpush.msra.mxu0 %v1066
    %1201 = vmatpush.msra.mxu0 %v1065
    %1202 = vmatpush.msra.mxu0 %v1064
    %1203 = vmatpush.msra.mxu0 %v1063
    %1204 = vmatpush.msra.mxu0 %v1062
    %1205 = vmatpush.msra.mxu0 %v1061
    %1206 = vmatpush.msra.mxu0 %v1060
    %1207 = vmatmul.f32.gmra.mxu0 %v1079
    %v1208 = vpop.f32.mrf.mxu0
    %v1209 = vadd.f32 %v1189, %v1208
    %1210 = vdwg.mxu0
    %v1211 = vtanh.pop %v1209
    %1212 = vst [vmem:[#allocation2] sm:$0x3] %v1211
    %v1213 = vld [vmem:[%s257] sm:$0x3]
    %v1215 = vrot.slane %v1211, 1
    %v1216 = vperm.slane %v1211, 0
    %v1217 = vperm.slane %v1215, 0
    %v1220 = vmul.f32 %v1216, %v27
    %v1221 = vmul.f32 %v1217, %v28
    %1222 = vadd.xlane.f32.xlu0 %v1220
    %v1223 = vpop.xlane.xlu0 %1222
    %1224 = vadd.xlane.f32.xlu0 %v1221
    %v1225 = vpop.xlane.xlu0 %1224
    %v1228 = vperm.slane %v1223, %v136
    %v1229 = vperm.slane %v1225, %v136
    %v1230 = vsel %vm139, %v1229, %v1228
    %v1232 = vsel %vm142, %v1230, -inf
    %1233 = vmax.xlane.f32.xlu0 %v1232
    %v1234 = vpop.xlane.xlu0 %1233
    %v1236 = vperm.slane %v1234, 0
    %v1237 = vperm.slane %v1234, 1
    %v1240 = vsub.f32 %v1223, %v1236
    %v1241 = vsub.f32 %v1225, %v1237
    %v1242 = vmul.f32 %v1240, 1.442695
    %v1243 = vpow.pop %v1242
    %v1244 = vmul.f32 %v1241, 1.442695
    %v1245 = vpow.pop %v1244
    %1248 = vset.pattern.permute.xlu0 0
    %1249 = vperm.xlu0 %1248, %v1243
    %v1250 = vpop.permute.xlu0 %1249
    %1251 = vset.pattern.permute.xlu0 0
    %1252 = vperm.xlu0 %1251, %v1245
    %v1253 = vpop.permute.xlu0 %1252
    %v1254 = vperm.slane %v1250, %v136
    %v1255 = vperm.slane %v1253, %v136
    %v1256 = vsel %vm139, %v1255, %v1254
    %v1258 = vsel %vm142, %v1256, 0.0
    %1259 = vadd.xlane.f32.xlu0 %v1258
    %v1260 = vpop.xlane.xlu0 %1259
    %v1261 = vrcp.pop %v1260
    %v1262 = vmul.f32 %v1260, %v1261
    %v1263 = vsub.f32 2.0, %v1262
    %v1264 = vmul.f32 %v1261, %v1263
    %v1266 = vperm.slane %v1264, 0
    %v1267 = vperm.slane %v1264, 1
    %v1270 = vmul.f32 %v1243, %v1266
    %v1271 = vmul.f32 %v1245, %v1267
    %1273 = vset.pattern.permute.xlu0 0
    %1274 = vperm.xlu0 %1273, %v1270
    %v1275 = vpop.permute.xlu0 %1274
    %1278 = vset.pattern.permute.xlu0 0
    %1279 = vperm.xlu0 %1278, %v1271
    %v1280 = vpop.permute.xlu0 %1279
    %v1282 = vmul.f32 %v1275, %v67
    %v1283 = vmul.f32 %v1280, %v70
    %v1284 = vrot.slane %v1282, 4
    %v1285 = vadd.f32 %v1282, %v1284
    %v1286 = vrot.slane %v1285, 2
    %v1287 = vadd.f32 %v1285, %v1286
    %v1288 = vrot.slane %v1287, 1
    %v1289 = vadd.f32 %v1287, %v1288
    %v1290 = vrot.slane %v1283, 4
    %v1291 = vadd.f32 %v1283, %v1290
    %v1292 = vrot.slane %v1291, 2
    %v1293 = vadd.f32 %v1291, %v1292
    %v1294 = vrot.slane %v1293, 1
    %v1295 = vadd.f32 %v1293, %v1294
    %v1298 = vsel %vm139, %v1295, %v1289
    %v1300 = vadd.f32 %v1213, %v1298
    %1301 = vmatpush.msra.mxu0 %v1059
    %1302 = vmatpush.msra.mxu0 %v1058
    %1303 = vmatpush.msra.mxu0 %v1057
    %1304 = vmatpush.msra.mxu0 %v1056
    %1305 = vmatpush.msra.mxu0 %v1055
    %1306 = vmatpush.msra.mxu0 %v1054
    %1307 = vmatpush.msra.mxu0 %v1053
    %1308 = vmatpush.msra.mxu0 %v1052
    %1309 = vmatpush.msra.mxu0 %v1051
    %1310 = vmatpush.msra.mxu0 %v1050
    %1311 = vmatpush.msra.mxu0 %v1049
    %1312 = vmatpush.msra.mxu0 %v1048
    %1313 = vmatpush.msra.mxu0 %v1047
    %1314 = vmatpush.msra.mxu0 %v1046
    %1315 = vmatpush.msra.mxu0 %v1045
    %1316 = vmatpush.msra.mxu0 %v1044
    %1317 = vmatmul.f32.gmra.mxu0 %v1300
    %v1318 = vpop.f32.mrf.mxu0
    %v1319 = vadd.f32 %v1169, %v1318
    %1320 = vdwg.mxu0
    %1321 = vmatpush.msra.mxu0 %v1075
    %1322 = vmatpush.msra.mxu0 %v1074
    %1323 = vmatpush.msra.mxu0 %v1073
    %1324 = vmatpush.msra.mxu0 %v1072
    %1325 = vmatpush.msra.mxu0 %v1071
    %1326 = vmatpush.msra.mxu0 %v1070
    %1327 = vmatpush.msra.mxu0 %v1069
    %1328 = vmatpush.msra.mxu0 %v1068
    %1329 = vmatpush.msra.mxu0 %v1067
    %1330 = vmatpush.msra.mxu0 %v1066
    %1331 = vmatpush.msra.mxu0 %v1065
    %1332 = vmatpush.msra.mxu0 %v1064
    %1333 = vmatpush.msra.mxu0 %v1063
    %1334 = vmatpush.msra.mxu0 %v1062
    %1335 = vmatpush.msra.mxu0 %v1061
    %1336 = vmatpush.msra.mxu0 %v1060
    %1337 = vmatmul.f32.gmra.mxu0 %v1211
    %v1338 = vpop.f32.mrf.mxu0
    %v1339 = vadd.f32 %v1319, %v1338
    %1340 = vdwg.mxu0
    %v1341 = vtanh.pop %v1339
    %1342 = vst [vmem:[%s257] sm:$0x3] %v1341
    %v1343 = vld [vmem:[%s388] sm:$0x3]
    %v1345 = vrot.slane %v1341, 1
    %v1346 = vperm.slane %v1341, 0
    %v1347 = vperm.slane %v1345, 0
    %v1350 = vmul.f32 %v1346, %v27
    %v1351 = vmul.f32 %v1347, %v28
    %1352 = vadd.xlane.f32.xlu0 %v1350
    %v1353 = vpop.xlane.xlu0 %1352
    %1354 = vadd.xlane.f32.xlu0 %v1351
    %v1355 = vpop.xlane.xlu0 %1354
    %v1358 = vperm.slane %v1353, %v136
    %v1359 = vperm.slane %v1355, %v136
    %v1360 = vsel %vm139, %v1359, %v1358
    %v1362 = vsel %vm142, %v1360, -inf
    %1363 = vmax.xlane.f32.xlu0 %v1362
    %v1364 = vpop.xlane.xlu0 %1363
    %v1366 = vperm.slane %v1364, 0
    %v1367 = vperm.slane %v1364, 1
    %v1370 = vsub.f32 %v1353, %v1366
    %v1371 = vsub.f32 %v1355, %v1367
    %v1372 = vmul.f32 %v1370, 1.442695
    %v1373 = vpow.pop %v1372
    %v1374 = vmul.f32 %v1371, 1.442695
    %v1375 = vpow.pop %v1374
    %1378 = vset.pattern.permute.xlu0 0
    %1379 = vperm.xlu0 %1378, %v1373
    %v1380 = vpop.permute.xlu0 %1379
    %1381 = vset.pattern.permute.xlu0 0
    %1382 = vperm.xlu0 %1381, %v1375
    %v1383 = vpop.permute.xlu0 %1382
    %v1384 = vperm.slane %v1380, %v136
    %v1385 = vperm.slane %v1383, %v136
    %v1386 = vsel %vm139, %v1385, %v1384
    %v1388 = vsel %vm142, %v1386, 0.0
    %1389 = vadd.xlane.f32.xlu0 %v1388
    %v1390 = vpop.xlane.xlu0 %1389
    %v1391 = vrcp.pop %v1390
    %v1392 = vmul.f32 %v1390, %v1391
    %v1393 = vsub.f32 2.0, %v1392
    %v1394 = vmul.f32 %v1391, %v1393
    %v1396 = vperm.slane %v1394, 0
    %v1397 = vperm.slane %v1394, 1
    %v1400 = vmul.f32 %v1373, %v1396
    %v1401 = vmul.f32 %v1375, %v1397
    %1403 = vset.pattern.permute.xlu0 0
    %1404 = vperm.xlu0 %1403, %v1400
    %v1405 = vpop.permute.xlu0 %1404
    %1408 = vset.pattern.permute.xlu0 0
    %1409 = vperm.xlu0 %1408, %v1401
    %v1410 = vpop.permute.xlu0 %1409
    %v1412 = vmul.f32 %v1405, %v67
    %v1413 = vmul.f32 %v1410, %v70
    %v1414 = vrot.slane %v1412, 4
    %v1415 = vadd.f32 %v1412, %v1414
    %v1416 = vrot.slane %v1415, 2
    %v1417 = vadd.f32 %v1415, %v1416
    %v1418 = vrot.slane %v1417, 1
    %v1419 = vadd.f32 %v1417, %v1418
    %v1420 = vrot.slane %v1413, 4
    %v1421 = vadd.f32 %v1413, %v1420
    %v1422 = vrot.slane %v1421, 2
    %v1423 = vadd.f32 %v1421, %v1422
    %v1424 = vrot.slane %v1423, 1
    %v1425 = vadd.f32 %v1423, %v1424
    %v1428 = vsel %vm139, %v1425, %v1419
    %v1430 = vadd.f32 %v1343, %v1428
    %1431 = vmatpush.msra.mxu0 %v1059
    %1432 = vmatpush.msra.mxu0 %v1058
    %1433 = vmatpush.msra.mxu0 %v1057
    %1434 = vmatpush.msra.mxu0 %v1056
    %1435 = vmatpush.msra.mxu0 %v1055
    %1436 = vmatpush.msra.mxu0 %v1054
    %1437 = vmatpush.msra.mxu0 %v1053
    %1438 = vmatpush.msra.mxu0 %v1052
    %1439 = vmatpush.msra.mxu0 %v1051
    %1440 = vmatpush.msra.mxu0 %v1050
    %1441 = vmatpush.msra.mxu0 %v1049
    %1442 = vmatpush.msra.mxu0 %v1048
    %1443 = vmatpush.msra.mxu0 %v1047
    %1444 = vmatpush.msra.mxu0 %v1046
    %1445 = vmatpush.msra.mxu0 %v1045
    %1446 = vmatpush.msra.mxu0 %v1044
    %1447 = vmatmul.f32.gmra.mxu0 %v1430
    %v1448 = vpop.f32.mrf.mxu0
    %v1449 = vadd.f32 %v1169, %v1448
    %1450 = vdwg.mxu0
    %1451 = vmatpush.msra.mxu0 %v1075
    %1452 = vmatpush.msra.mxu0 %v1074
    %1453 = vmatpush.msra.mxu0 %v1073
    %1454 = vmatpush.msra.mxu0 %v1072
    %1455 = vmatpush.msra.mxu0 %v1071
    %1456 = vmatpush.msra.mxu0 %v1070
    %1457 = vmatpush.msra.mxu0 %v1069
    %1458 = vmatpush.msra.mxu0 %v1068
    %1459 = vmatpush.msra.mxu0 %v1067
    %1460 = vmatpush.msra.mxu0 %v1066
    %1461 = vmatpush.msra.mxu0 %v1065
    %1462 = vmatpush.msra.mxu0 %v1064
    %1463 = vmatpush.msra.mxu0 %v1063
    %1464 = vmatpush.msra.mxu0 %v1062
    %1465 = vmatpush.msra.mxu0 %v1061
    %1466 = vmatpush.msra.mxu0 %v1060
    %1467 = vmatmul.f32.gmra.mxu0 %v1341
    %v1468 = vpop.f32.mrf.mxu0
    %v1469 = vadd.f32 %v1449, %v1468
    %1470 = vdwg.mxu0
    %v1471 = vtanh.pop %v1469
    %1472 = vst [vmem:[%s388] sm:$0x3] %v1471
    %v1473 = vld [vmem:[%s519] sm:$0x3]
    %v1475 = vrot.slane %v1471, 1
    %v1476 = vperm.slane %v1471, 0
    %v1477 = vperm.slane %v1475, 0
    %v1480 = vmul.f32 %v1476, %v27
    %v1481 = vmul.f32 %v1477, %v28
    %1482 = vadd.xlane.f32.xlu0 %v1480
    %v1483 = vpop.xlane.xlu0 %1482
    %1484 = vadd.xlane.f32.xlu0 %v1481
    %v1485 = vpop.xlane.xlu0 %1484
    %v1488 = vperm.slane %v1483, %v136
    %v1489 = vperm.slane %v1485, %v136
    %v1490 = vsel %vm139, %v1489, %v1488
    %v1492 = vsel %vm142, %v1490, -inf
    %1493 = vmax.xlane.f32.xlu0 %v1492
    %v1494 = vpop.xlane.xlu0 %1493
    %v1496 = vperm.slane %v1494, 0
    %v1497 = vperm.slane %v1494, 1
    %v1500 = vsub.f32 %v1483, %v1496
    %v1501 = vsub.f32 %v1485, %v1497
    %v1502 = vmul.f32 %v1500, 1.442695
    %v1503 = vpow.pop %v1502
    %v1504 = vmul.f32 %v1501, 1.442695
    %v1505 = vpow.pop %v1504
    %1508 = vset.pattern.permute.xlu0 0
    %1509 = vperm.xlu0 %1508, %v1503
    %v1510 = vpop.permute.xlu0 %1509
    %1511 = vset.pattern.permute.xlu0 0
    %1512 = vperm.xlu0 %1511, %v1505
    %v1513 = vpop.permute.xlu0 %1512
    %v1514 = vperm.slane %v1510, %v136
    %v1515 = vperm.slane %v1513, %v136
    %v1516 = vsel %vm139, %v1515, %v1514
    %v1518 = vsel %vm142, %v1516, 0.0
    %1519 = vadd.xlane.f32.xlu0 %v1518
    %v1520 = vpop.xlane.xlu0 %1519
    %v1521 = vrcp.pop %v1520
    %v1522 = vmul.f32 %v1520, %v1521
    %v1523 = vsub.f32 2.0, %v1522
    %v1524 = vmul.f32 %v1521, %v1523
    %v1526 = vperm.slane %v1524, 0
    %v1527 = vperm.slane %v1524, 1
    %v1530 = vmul.f32 %v1503, %v1526
    %v1531 = vmul.f32 %v1505, %v1527
    %1533 = vset.pattern.permute.xlu0 0
    %1534 = vperm.xlu0 %1533, %v1530
    %v1535 = vpop.permute.xlu0 %1534
    %1538 = vset.pattern.permute.xlu0 0
    %1539 = vperm.xlu0 %1538, %v1531
    %v1540 = vpop.permute.xlu0 %1539
    %v1542 = vmul.f32 %v1535, %v67
    %v1543 = vmul.f32 %v1540, %v70
    %v1544 = vrot.slane %v1542, 4
    %v1545 = vadd.f32 %v1542, %v1544
    %v1546 = vrot.slane %v1545, 2
    %v1547 = vadd.f32 %v1545, %v1546
    %v1548 = vrot.slane %v1547, 1
    %v1549 = vadd.f32 %v1547, %v1548
    %v1550 = vrot.slane %v1543, 4
    %v1551 = vadd.f32 %v1543, %v1550
    %v1552 = vrot.slane %v1551, 2
    %v1553 = vadd.f32 %v1551, %v1552
    %v1554 = vrot.slane %v1553, 1
    %v1555 = vadd.f32 %v1553, %v1554
    %v1558 = vsel %vm139, %v1555, %v1549
    %v1560 = vadd.f32 %v1473, %v1558
    %1561 = vmatpush.msra.mxu0 %v1059
    %1562 = vmatpush.msra.mxu0 %v1058
    %1563 = vmatpush.msra.mxu0 %v1057
    %1564 = vmatpush.msra.mxu0 %v1056
    %1565 = vmatpush.msra.mxu0 %v1055
    %1566 = vmatpush.msra.mxu0 %v1054
    %1567 = vmatpush.msra.mxu0 %v1053
    %1568 = vmatpush.msra.mxu0 %v1052
    %1569 = vmatpush.msra.mxu0 %v1051
    %1570 = vmatpush.msra.mxu0 %v1050
    %1571 = vmatpush.msra.mxu0 %v1049
    %1572 = vmatpush.msra.mxu0 %v1048
    %1573 = vmatpush.msra.mxu0 %v1047
    %1574 = vmatpush.msra.mxu0 %v1046
    %1575 = vmatpush.msra.mxu0 %v1045
    %1576 = vmatpush.msra.mxu0 %v1044
    %1577 = vmatmul.f32.gmra.mxu0 %v1560
    %v1578 = vpop.f32.mrf.mxu0
    %v1579 = vadd.f32 %v1169, %v1578
    %1580 = vdwg.mxu0
    %1581 = vmatpush.msra.mxu0 %v1075
    %1582 = vmatpush.msra.mxu0 %v1074
    %1583 = vmatpush.msra.mxu0 %v1073
    %1584 = vmatpush.msra.mxu0 %v1072
    %1585 = vmatpush.msra.mxu0 %v1071
    %1586 = vmatpush.msra.mxu0 %v1070
    %1587 = vmatpush.msra.mxu0 %v1069
    %1588 = vmatpush.msra.mxu0 %v1068
    %1589 = vmatpush.msra.mxu0 %v1067
    %1590 = vmatpush.msra.mxu0 %v1066
    %1591 = vmatpush.msra.mxu0 %v1065
    %1592 = vmatpush.msra.mxu0 %v1064
    %1593 = vmatpush.msra.mxu0 %v1063
    %1594 = vmatpush.msra.mxu0 %v1062
    %1595 = vmatpush.msra.mxu0 %v1061
    %1596 = vmatpush.msra.mxu0 %v1060
    %1597 = vmatmul.f32.gmra.mxu0 %v1471
    %v1598 = vpop.f32.mrf.mxu0
    %v1599 = vadd.f32 %v1579, %v1598
    %1600 = vdwg.mxu0
    %v1601 = vtanh.pop %v1599
    %1602 = vst [vmem:[%s519] sm:$0x3] %v1601
    %v1603 = vld [vmem:[%s650] sm:$0x3]
    %v1605 = vrot.slane %v1601, 1
    %v1606 = vperm.slane %v1601, 0
    %v1607 = vperm.slane %v1605, 0
    %v1610 = vmul.f32 %v1606, %v27
    %v1611 = vmul.f32 %v1607, %v28
    %1612 = vadd.xlane.f32.xlu0 %v1610
    %v1613 = vpop.xlane.xlu0 %1612
    %1614 = vadd.xlane.f32.xlu0 %v1611
    %v1615 = vpop.xlane.xlu0 %1614
    %v1618 = vperm.slane %v1613, %v136
    %v1619 = vperm.slane %v1615, %v136
    %v1620 = vsel %vm139, %v1619, %v1618
    %v1622 = vsel %vm142, %v1620, -inf
    %1623 = vmax.xlane.f32.xlu0 %v1622
    %v1624 = vpop.xlane.xlu0 %1623
    %v1626 = vperm.slane %v1624, 0
    %v1627 = vperm.slane %v1624, 1
    %v1630 = vsub.f32 %v1613, %v1626
    %v1631 = vsub.f32 %v1615, %v1627
    %v1632 = vmul.f32 %v1630, 1.442695
    %v1633 = vpow.pop %v1632
    %v1634 = vmul.f32 %v1631, 1.442695
    %v1635 = vpow.pop %v1634
    %1638 = vset.pattern.permute.xlu0 0
    %1639 = vperm.xlu0 %1638, %v1633
    %v1640 = vpop.permute.xlu0 %1639
    %1641 = vset.pattern.permute.xlu0 0
    %1642 = vperm.xlu0 %1641, %v1635
    %v1643 = vpop.permute.xlu0 %1642
    %v1644 = vperm.slane %v1640, %v136
    %v1645 = vperm.slane %v1643, %v136
    %v1646 = vsel %vm139, %v1645, %v1644
    %v1648 = vsel %vm142, %v1646, 0.0
    %1649 = vadd.xlane.f32.xlu0 %v1648
    %v1650 = vpop.xlane.xlu0 %1649
    %v1651 = vrcp.pop %v1650
    %v1652 = vmul.f32 %v1650, %v1651
    %v1653 = vsub.f32 2.0, %v1652
    %v1654 = vmul.f32 %v1651, %v1653
    %v1656 = vperm.slane %v1654, 0
    %v1657 = vperm.slane %v1654, 1
    %v1660 = vmul.f32 %v1633, %v1656
    %v1661 = vmul.f32 %v1635, %v1657
    %1663 = vset.pattern.permute.xlu0 0
    %1664 = vperm.xlu0 %1663, %v1660
    %v1665 = vpop.permute.xlu0 %1664
    %1668 = vset.pattern.permute.xlu0 0
    %1669 = vperm.xlu0 %1668, %v1661
    %v1670 = vpop.permute.xlu0 %1669
    %v1672 = vmul.f32 %v1665, %v67
    %v1673 = vmul.f32 %v1670, %v70
    %v1674 = vrot.slane %v1672, 4
    %v1675 = vadd.f32 %v1672, %v1674
    %v1676 = vrot.slane %v1675, 2
    %v1677 = vadd.f32 %v1675, %v1676
    %v1678 = vrot.slane %v1677, 1
    %v1679 = vadd.f32 %v1677, %v1678
    %v1680 = vrot.slane %v1673, 4
    %v1681 = vadd.f32 %v1673, %v1680
    %v1682 = vrot.slane %v1681, 2
    %v1683 = vadd.f32 %v1681, %v1682
    %v1684 = vrot.slane %v1683, 1
    %v1685 = vadd.f32 %v1683, %v1684
    %v1688 = vsel %vm139, %v1685, %v1679
    %v1690 = vadd.f32 %v1603, %v1688
    %1691 = vmatpush.msra.mxu0 %v1059
    %1692 = vmatpush.msra.mxu0 %v1058
    %1693 = vmatpush.msra.mxu0 %v1057
    %1694 = vmatpush.msra.mxu0 %v1056
    %1695 = vmatpush.msra.mxu0 %v1055
    %1696 = vmatpush.msra.mxu0 %v1054
    %1697 = vmatpush.msra.mxu0 %v1053
    %1698 = vmatpush.msra.mxu0 %v1052
    %1699 = vmatpush.msra.mxu0 %v1051
    %1700 = vmatpush.msra.mxu0 %v1050
    %1701 = vmatpush.msra.mxu0 %v1049
    %1702 = vmatpush.msra.mxu0 %v1048
    %1703 = vmatpush.msra.mxu0 %v1047
    %1704 = vmatpush.msra.mxu0 %v1046
    %1705 = vmatpush.msra.mxu0 %v1045
    %1706 = vmatpush.msra.mxu0 %v1044
    %1707 = vmatmul.f32.gmra.mxu0 %v1690
    %v1708 = vpop.f32.mrf.mxu0
    %v1709 = vadd.f32 %v1169, %v1708
    %1710 = vdwg.mxu0
    %1711 = vmatpush.msra.mxu0 %v1075
    %1712 = vmatpush.msra.mxu0 %v1074
    %1713 = vmatpush.msra.mxu0 %v1073
    %1714 = vmatpush.msra.mxu0 %v1072
    %1715 = vmatpush.msra.mxu0 %v1071
    %1716 = vmatpush.msra.mxu0 %v1070
    %1717 = vmatpush.msra.mxu0 %v1069
    %1718 = vmatpush.msra.mxu0 %v1068
    %1719 = vmatpush.msra.mxu0 %v1067
    %1720 = vmatpush.msra.mxu0 %v1066
    %1721 = vmatpush.msra.mxu0 %v1065
    %1722 = vmatpush.msra.mxu0 %v1064
    %1723 = vmatpush.msra.mxu0 %v1063
    %1724 = vmatpush.msra.mxu0 %v1062
    %1725 = vmatpush.msra.mxu0 %v1061
    %1726 = vmatpush.msra.mxu0 %v1060
    %1727 = vmatmul.f32.gmra.mxu0 %v1601
    %v1728 = vpop.f32.mrf.mxu0
    %v1729 = vadd.f32 %v1709, %v1728
    %1730 = vdwg.mxu0
    %v1731 = vtanh.pop %v1729
    %1732 = vst [vmem:[%s650] sm:$0x3] %v1731
    %v1733 = vld [vmem:[%s781] sm:$0x3]
    %v1735 = vrot.slane %v1731, 1
    %v1736 = vperm.slane %v1731, 0
    %v1737 = vperm.slane %v1735, 0
    %v1740 = vmul.f32 %v1736, %v27
    %v1741 = vmul.f32 %v1737, %v28
    %1742 = vadd.xlane.f32.xlu0 %v1740
    %v1743 = vpop.xlane.xlu0 %1742
    %1744 = vadd.xlane.f32.xlu0 %v1741
    %v1745 = vpop.xlane.xlu0 %1744
    %v1748 = vperm.slane %v1743, %v136
    %v1749 = vperm.slane %v1745, %v136
    %v1750 = vsel %vm139, %v1749, %v1748
    %v1752 = vsel %vm142, %v1750, -inf
    %1753 = vmax.xlane.f32.xlu0 %v1752
    %v1754 = vpop.xlane.xlu0 %1753
    %v1756 = vperm.slane %v1754, 0
    %v1757 = vperm.slane %v1754, 1
    %v1760 = vsub.f32 %v1743, %v1756
    %v1761 = vsub.f32 %v1745, %v1757
    %v1762 = vmul.f32 %v1760, 1.442695
    %v1763 = vpow.pop %v1762
    %v1764 = vmul.f32 %v1761, 1.442695
    %v1765 = vpow.pop %v1764
    %1768 = vset.pattern.permute.xlu0 0
    %1769 = vperm.xlu0 %1768, %v1763
    %v1770 = vpop.permute.xlu0 %1769
    %1771 = vset.pattern.permute.xlu0 0
    %1772 = vperm.xlu0 %1771, %v1765
    %v1773 = vpop.permute.xlu0 %1772
    %v1774 = vperm.slane %v1770, %v136
    %v1775 = vperm.slane %v1773, %v136
    %v1776 = vsel %vm139, %v1775, %v1774
    %v1778 = vsel %vm142, %v1776, 0.0
    %1779 = vadd.xlane.f32.xlu0 %v1778
    %v1780 = vpop.xlane.xlu0 %1779
    %v1781 = vrcp.pop %v1780
    %v1782 = vmul.f32 %v1780, %v1781
    %v1783 = vsub.f32 2.0, %v1782
    %v1784 = vmul.f32 %v1781, %v1783
    %v1786 = vperm.slane %v1784, 0
    %v1787 = vperm.slane %v1784, 1
    %v1790 = vmul.f32 %v1763, %v1786
    %v1791 = vmul.f32 %v1765, %v1787
    %1793 = vset.pattern.permute.xlu0 0
    %1794 = vperm.xlu0 %1793, %v1790
    %v1795 = vpop.permute.xlu0 %1794
    %1798 = vset.pattern.permute.xlu0 0
    %1799 = vperm.xlu0 %1798, %v1791
    %v1800 = vpop.permute.xlu0 %1799
    %v1802 = vmul.f32 %v1795, %v67
    %v1803 = vmul.f32 %v1800, %v70
    %v1804 = vrot.slane %v1802, 4
    %v1805 = vadd.f32 %v1802, %v1804
    %v1806 = vrot.slane %v1805, 2
    %v1807 = vadd.f32 %v1805, %v1806
    %v1808 = vrot.slane %v1807, 1
    %v1809 = vadd.f32 %v1807, %v1808
    %v1810 = vrot.slane %v1803, 4
    %v1811 = vadd.f32 %v1803, %v1810
    %v1812 = vrot.slane %v1811, 2
    %v1813 = vadd.f32 %v1811, %v1812
    %v1814 = vrot.slane %v1813, 1
    %v1815 = vadd.f32 %v1813, %v1814
    %v1818 = vsel %vm139, %v1815, %v1809
    %v1820 = vadd.f32 %v1733, %v1818
    %1821 = vmatpush.msra.mxu0 %v1059
    %1822 = vmatpush.msra.mxu0 %v1058
    %1823 = vmatpush.msra.mxu0 %v1057
    %1824 = vmatpush.msra.mxu0 %v1056
    %1825 = vmatpush.msra.mxu0 %v1055
    %1826 = vmatpush.msra.mxu0 %v1054
    %1827 = vmatpush.msra.mxu0 %v1053
    %1828 = vmatpush.msra.mxu0 %v1052
    %1829 = vmatpush.msra.mxu0 %v1051
    %1830 = vmatpush.msra.mxu0 %v1050
    %1831 = vmatpush.msra.mxu0 %v1049
    %1832 = vmatpush.msra.mxu0 %v1048
    %1833 = vmatpush.msra.mxu0 %v1047
    %1834 = vmatpush.msra.mxu0 %v1046
    %1835 = vmatpush.msra.mxu0 %v1045
    %1836 = vmatpush.msra.mxu0 %v1044
    %1837 = vmatmul.f32.gmra.mxu0 %v1820
    %v1838 = vpop.f32.mrf.mxu0
    %v1839 = vadd.f32 %v1169, %v1838
    %1840 = vdwg.mxu0
    %1841 = vmatpush.msra.mxu0 %v1075
    %1842 = vmatpush.msra.mxu0 %v1074
    %1843 = vmatpush.msra.mxu0 %v1073
    %1844 = vmatpush.msra.mxu0 %v1072
    %1845 = vmatpush.msra.mxu0 %v1071
    %1846 = vmatpush.msra.mxu0 %v1070
    %1847 = vmatpush.msra.mxu0 %v1069
    %1848 = vmatpush.msra.mxu0 %v1068
    %1849 = vmatpush.msra.mxu0 %v1067
    %1850 = vmatpush.msra.mxu0 %v1066
    %1851 = vmatpush.msra.mxu0 %v1065
    %1852 = vmatpush.msra.mxu0 %v1064
    %1853 = vmatpush.msra.mxu0 %v1063
    %1854 = vmatpush.msra.mxu0 %v1062
    %1855 = vmatpush.msra.mxu0 %v1061
    %1856 = vmatpush.msra.mxu0 %v1060
    %1857 = vmatmul.f32.gmra.mxu0 %v1731
    %v1858 = vpop.f32.mrf.mxu0
    %v1859 = vadd.f32 %v1839, %v1858
    %1860 = vdwg.mxu0
    %v1861 = vtanh.pop %v1859
    %1862 = vst [vmem:[%s781] sm:$0x3] %v1861
    %v1863 = vld [vmem:[%s912] sm:$0x3]
    %v1865 = vrot.slane %v1861, 1
    %v1866 = vperm.slane %v1861, 0
    %v1867 = vperm.slane %v1865, 0
    %v1870 = vmul.f32 %v1866, %v27
    %v1871 = vmul.f32 %v1867, %v28
    %1872 = vadd.xlane.f32.xlu0 %v1870
    %v1873 = vpop.xlane.xlu0 %1872
    %1874 = vadd.xlane.f32.xlu0 %v1871
    %v1875 = vpop.xlane.xlu0 %1874
    %v1878 = vperm.slane %v1873, %v136
    %v1879 = vperm.slane %v1875, %v136
    %v1880 = vsel %vm139, %v1879, %v1878
    %v1882 = vsel %vm142, %v1880, -inf
    %1883 = vmax.xlane.f32.xlu0 %v1882
    %v1884 = vpop.xlane.xlu0 %1883
    %v1886 = vperm.slane %v1884, 0
    %v1887 = vperm.slane %v1884, 1
    %v1890 = vsub.f32 %v1873, %v1886
    %v1891 = vsub.f32 %v1875, %v1887
    %v1892 = vmul.f32 %v1890, 1.442695
    %v1893 = vpow.pop %v1892
    %v1894 = vmul.f32 %v1891, 1.442695
    %v1895 = vpow.pop %v1894
    %1898 = vset.pattern.permute.xlu0 0
    %1899 = vperm.xlu0 %1898, %v1893
    %v1900 = vpop.permute.xlu0 %1899
    %1901 = vset.pattern.permute.xlu0 0
    %1902 = vperm.xlu0 %1901, %v1895
    %v1903 = vpop.permute.xlu0 %1902
    %v1904 = vperm.slane %v1900, %v136
    %v1905 = vperm.slane %v1903, %v136
    %v1906 = vsel %vm139, %v1905, %v1904
    %v1908 = vsel %vm142, %v1906, 0.0
    %1909 = vadd.xlane.f32.xlu0 %v1908
    %v1910 = vpop.xlane.xlu0 %1909
    %v1911 = vrcp.pop %v1910
    %v1912 = vmul.f32 %v1910, %v1911
    %v1913 = vsub.f32 2.0, %v1912
    %v1914 = vmul.f32 %v1911, %v1913
    %v1916 = vperm.slane %v1914, 0
    %v1917 = vperm.slane %v1914, 1
    %v1920 = vmul.f32 %v1893, %v1916
    %v1921 = vmul.f32 %v1895, %v1917
    %1923 = vset.pattern.permute.xlu0 0
    %1924 = vperm.xlu0 %1923, %v1920
    %v1925 = vpop.permute.xlu0 %1924
    %1928 = vset.pattern.permute.xlu0 0
    %1929 = vperm.xlu0 %1928, %v1921
    %v1930 = vpop.permute.xlu0 %1929
    %v1932 = vmul.f32 %v1925, %v67
    %v1933 = vmul.f32 %v1930, %v70
    %v1934 = vrot.slane %v1932, 4
    %v1935 = vadd.f32 %v1932, %v1934
    %v1936 = vrot.slane %v1935, 2
    %v1937 = vadd.f32 %v1935, %v1936
    %v1938 = vrot.slane %v1937, 1
    %v1939 = vadd.f32 %v1937, %v1938
    %v1940 = vrot.slane %v1933, 4
    %v1941 = vadd.f32 %v1933, %v1940
    %v1942 = vrot.slane %v1941, 2
    %v1943 = vadd.f32 %v1941, %v1942
    %v1944 = vrot.slane %v1943, 1
    %v1945 = vadd.f32 %v1943, %v1944
    %v1948 = vsel %vm139, %v1945, %v1939
    %v1950 = vadd.f32 %v1863, %v1948
    %1951 = vmatpush.msra.mxu0 %v1059
    %1952 = vmatpush.msra.mxu0 %v1058
    %1953 = vmatpush.msra.mxu0 %v1057
    %1954 = vmatpush.msra.mxu0 %v1056
    %1955 = vmatpush.msra.mxu0 %v1055
    %1956 = vmatpush.msra.mxu0 %v1054
    %1957 = vmatpush.msra.mxu0 %v1053
    %1958 = vmatpush.msra.mxu0 %v1052
    %1959 = vmatpush.msra.mxu0 %v1051
    %1960 = vmatpush.msra.mxu0 %v1050
    %1961 = vmatpush.msra.mxu0 %v1049
    %1962 = vmatpush.msra.mxu0 %v1048
    %1963 = vmatpush.msra.mxu0 %v1047
    %1964 = vmatpush.msra.mxu0 %v1046
    %1965 = vmatpush.msra.mxu0 %v1045
    %1966 = vmatpush.msra.mxu0 %v1044
    %1967 = vmatmul.f32.gmra.mxu0 %v1950
    %v1968 = vpop.f32.mrf.mxu0
    %v1969 = vadd.f32 %v1169, %v1968
    %1970 = vdwg.mxu0
    %1971 = vmatpush.msra.mxu0 %v1075
    %1972 = vmatpush.msra.mxu0 %v1074
    %1973 = vmatpush.msra.mxu0 %v1073
    %1974 = vmatpush.msra.mxu0 %v1072
    %1975 = vmatpush.msra.mxu0 %v1071
    %1976 = vmatpush.msra.mxu0 %v1070
    %1977 = vmatpush.msra.mxu0 %v1069
    %1978 = vmatpush.msra.mxu0 %v1068
    %1979 = vmatpush.msra.mxu0 %v1067
    %1980 = vmatpush.msra.mxu0 %v1066
    %1981 = vmatpush.msra.mxu0 %v1065
    %1982 = vmatpush.msra.mxu0 %v1064
    %1983 = vmatpush.msra.mxu0 %v1063
    %1984 = vmatpush.msra.mxu0 %v1062
    %1985 = vmatpush.msra.mxu0 %v1061
    %1986 = vmatpush.msra.mxu0 %v1060
    %1987 = vmatmul.f32.gmra.mxu0 %v1861
    %v1988 = vpop.f32.mrf.mxu0
    %v1989 = vadd.f32 %v1969, %v1988
    %1990 = vdwg.mxu0
    %v1991 = vtanh.pop %v1989
    %1992 = vst [vmem:[%s912] sm:$0x3] %v1991
    // Predicated region
    $region30: #{attn_rnn_block_forward.1} parent=1 // pred_check
      _
    $region31: #{attn_rnn_block_forward.1} parent=1 // pred_check_branch
      %1994 = sbr.rel (0) target = $region33
    $region32: #{attn_rnn_block_forward.1} parent=1 // pred_region
      %1996 = vsyncadd [#allocation3], 0
      %s1997 = sshll.u32 [#allocation2], 4
      %s1998 = int_to_ptr.vmem [resolvable:$true] %s1997
      %s1999 = sshll.u32 %s7, 4
      %s2000 = int_to_ptr.hbm [resolvable:$true] %s1999
      %2005 = dma.vmem_to_hbm [thread:$0]  %s1998, 224, %s2000, [#allocation3], 32, 32, 2
    $region33: #{attn_rnn_block_forward.1} parent=1 // pred_fallthru
      _
    // Predicated region
    $region34: #{attn_rnn_block_forward.1} parent=1 // pred_check
      _
    $region35: #{attn_rnn_block_forward.1} parent=1 // pred_check_branch
      %2007 = sbr.rel (0) target = $region37
    $region36: #{attn_rnn_block_forward.1} parent=1 // pred_region
      %2009 = dma.done [#allocation3], 224
    $region37: #{attn_rnn_block_forward.1} parent=1 // pred_fallthru
      _
    %2010 = vsyncpa [#allocation3], 1

</llo_original>
